<compile_context>
chip_gen: v5e
topology: v5e:2x2
jax: 0.10.0
libtpu: 0.0.40
codegen_flags: <defaults>
</compile_context>

<pallas_src>
import functools
import math

import jax
import jax.numpy as jnp
from jax import lax
from jax.experimental import pallas as pl
from jax.experimental.pallas import tpu as pltpu


def cross_attn_kernel(idx_ref, q_ref, k_ref, v_ref,
                      w1t_ref, b1_ref, w2t_ref, b2_ref, w3t_ref, b3_ref,
                      out_ref, *, nh, dh, n_q, mnp, topk, tb):
    dim = nh * dh
    in_dt = q_ref.dtype
    # bf16 MXU inputs (multi-pass f32 matmuls avoided); accumulation stays f32.
    cdt = jnp.bfloat16 if in_dt == jnp.float32 else in_dt

    # ---- one in-VMEM relayout to batch-major (replaces the wrapper HBM transposes)
    qb = pltpu.einshape("qbd->bqd", q_ref[...])           # (tb, n_q, dim)
    kb = pltpu.einshape("kbd->bkd", k_ref[...])           # (tb, mnp, dim)
    vb = pltpu.einshape("kbd->bkd", v_ref[...])           # (tb, mnp, dim)

    # ---- fused linear projections over all TB batch elements (one MXU matmul each)
    qm = qb.reshape(tb * n_q, dim).astype(cdt)
    km = kb.reshape(tb * mnp, dim).astype(cdt)
    vm = vb.reshape(tb * mnp, dim).astype(cdt)

    qp = jnp.dot(qm, w1t_ref[...].astype(cdt),
                 preferred_element_type=jnp.float32) + b1_ref[...]
    kp = jnp.dot(km, w2t_ref[...].astype(cdt),
                 preferred_element_type=jnp.float32) + b2_ref[...]
    vp = jnp.dot(vm, w3t_ref[...].astype(cdt),
                 preferred_element_type=jnp.float32) + b3_ref[...]
    # (the 1/sqrt(dh) attention scale is pre-folded into w1t / b1 on the host)

    qc = qp.astype(cdt)
    kc = kp.astype(cdt)
    vc = vp.astype(cdt)

    # ---- top-k scatter mask, built once as booleans
    idx = idx_ref[...]                                           # (tb, n_q, topk) int32
    col = lax.broadcasted_iota(jnp.int32, (tb, n_q, mnp), 2)
    hit = col == idx[:, :, 0:1]
    for t in range(1, topk):                                     # topk small: unrolled
        hit = jnp.logical_or(hit, col == idx[:, :, t:t + 1])

    # ---- per-head attention (nh small: unrolled; switch to fori_loop/grid axis if nh grows)
    heads = []
    for h in range(nh):
        sl = slice(h * dh, (h + 1) * dh)
        qh = qc[:, sl].reshape(tb, n_q, dh)
        kh = kc[:, sl].reshape(tb, mnp, dh)
        vh = vc[:, sl].reshape(tb, mnp, dh)

        s = jnp.einsum('bqd,bkd->bqk', qh, kh,
                       preferred_element_type=jnp.float32)       # (tb, n_q, mnp)
        s = jnp.where(hit, s, jnp.float32(-1e9))                 # matches w*mask - 1e9*(1-mask)
        s = s - jnp.max(s, axis=-1, keepdims=True)
        e = jnp.exp(s)
        l = jnp.sum(e, axis=-1, keepdims=True)
        inv = pl.reciprocal(l, approx=True)                      # EUP slot
        inv = inv * (2.0 - l * inv)                              # one Newton step -> ~f32 accurate
        p = (e * inv).astype(cdt)
        heads.append(jnp.einsum('bqk,bkd->bqd', p, vh,
                                preferred_element_type=jnp.float32))

    # ---- assemble all heads, one lane-dense store in the native (np, bs, dim) layout
    o = jnp.concatenate(heads, axis=-1)                          # (tb, n_q, dim)
    out_ref[...] = pltpu.einshape("bqd->qbd", o).astype(out_ref.dtype)


def _vmem_limit_bytes():
    """~75% of this generation's VMEM (v5e/v6e 128 MiB, v7x 64 MiB), clamped."""
    cap = 64 * 1024 * 1024
    try:
        info = pltpu.get_tpu_info()
        cap = int(getattr(info, "vmem_capacity_bytes", cap))
    except Exception:
        pass
    return max(32 * 1024 * 1024, min(int(cap * 0.75), 100 * 1024 * 1024))


def _est_vmem_bytes(tb, n_q, mnp, dim, topk):
    """Rough per-step VMEM footprint: double-buffered blocks + kernel temporaries."""
    act_rows = tb * (n_q + 2 * mnp)
    vmem = 2 * act_rows * dim * 4                 # double-buffered q/k/v input blocks
    vmem += 2 * tb * n_q * dim * 4                # double-buffered output block
    vmem += 2 * tb * n_q * topk * 4               # double-buffered index block
    vmem += 2 * 3 * (dim * dim + dim) * 4         # double-buffered weights / biases
    vmem += act_rows * dim * (4 + 4 + 2)          # relayout + f32 projections + bf16 copies
    vmem += tb * n_q * mnp * 12                   # scores / exp / mask temporaries
    vmem += tb * n_q * dim * 8                    # per-head outputs + concatenated block
    return vmem


def _choose_tb(bs, n_q, mnp, dim, topk, vmem_limit):
    """Largest batch tile that (a) divides bs, (b) keeps the (.., tb, dim) blocks
    legal under the (8, 128) tiling rule (tb == bs or tb % 8 == 0) and (c) fits
    the VMEM budget.  Bigger tb -> bigger MXU M dimension, fewer grid steps."""
    cands = [d for d in range(1, bs + 1)
             if bs % d == 0 and (d == bs or d % 8 == 0)]
    budget = 0.8 * vmem_limit
    tb = cands[0]
    for d in cands:
        if _est_vmem_bytes(d, n_q, mnp, dim, topk) <= budget:
            tb = d
    return tb


def cross_attn(q, k, v, rns_indices, params, nh, tb=None):
    """q: (np, bs, dim); k, v: (mnp, bs, dim); rns_indices: (bs, np, topk).
    Returns (np, bs, dim), matching CrossAttn.forward."""
    n_q, bs, dim = q.shape
    mnp = k.shape[0]
    topk = rns_indices.shape[-1]
    assert dim % nh == 0, (dim, nh)
    dh = dim // nh

    vmem_limit = _vmem_limit_bytes()
    if tb is None:
        tb = _choose_tb(bs, n_q, mnp, dim, topk, vmem_limit)
    assert bs % tb == 0 and (tb == bs or tb % 8 == 0), (bs, tb)

    w1, b1, w2, b2, w3, b3 = params
    scale = 1.0 / math.sqrt(dh)
    w1t = (w1.T * scale).astype(q.dtype)                    # fold attention scale into Q proj
    b1r = (b1.astype(jnp.float32) * scale).reshape(1, dim)
    w2t = w2.T.astype(k.dtype)
    b2r = b2.astype(jnp.float32).reshape(1, dim)
    w3t = w3.T.astype(v.dtype)
    b3r = b3.astype(jnp.float32).reshape(1, dim)
    idx = rns_indices.astype(jnp.int32)

    kernel = functools.partial(cross_attn_kernel, nh=nh, dh=dh, n_q=n_q,
                               mnp=mnp, topk=topk, tb=tb)

    # NOTE: on v7x, when bs // tb < 2, a second "parallel" grid axis (over n_q or
    # heads) could feed both TensorCores; omitted here to keep the matmul M large.
    return pl.pallas_call(
        kernel,
        out_shape=jax.ShapeDtypeStruct((n_q, bs, dim), q.dtype),
        grid_spec=pltpu.PrefetchScalarGridSpec(
            num_scalar_prefetch=0,
            grid=(bs // tb,),
            in_specs=[
                pl.BlockSpec((tb, n_q, topk), lambda b: (b, 0, 0)),  # rns_indices (bs, np, topk)
                pl.BlockSpec((n_q, tb, dim), lambda b: (0, b, 0)),   # q (np, bs, dim) - no HBM transpose
                pl.BlockSpec((mnp, tb, dim), lambda b: (0, b, 0)),   # k (mnp, bs, dim)
                pl.BlockSpec((mnp, tb, dim), lambda b: (0, b, 0)),   # v (mnp, bs, dim)
                pl.BlockSpec((dim, dim), lambda b: (0, 0)),          # W1^T (scale folded in)
                pl.BlockSpec((1, dim), lambda b: (0, 0)),            # b1   (scale folded in)
                pl.BlockSpec((dim, dim), lambda b: (0, 0)),          # W2^T
                pl.BlockSpec((1, dim), lambda b: (0, 0)),            # b2
                pl.BlockSpec((dim, dim), lambda b: (0, 0)),          # W3^T
                pl.BlockSpec((1, dim), lambda b: (0, 0)),            # b3
            ],
            out_specs=pl.BlockSpec((n_q, tb, dim), lambda b: (0, b, 0)),
        ),
        compiler_params=pltpu.CompilerParams(
            dimension_semantics=("parallel",),
            vmem_limit_bytes=vmem_limit,
        ),
    )(idx, q, k, v, w1t, b1r, w2t, b2r, w3t, b3r)


def cross_attn_reference(q, k, v, rns_indices, params, nh):
    """Pure-JAX (f32) mirror of the PyTorch forward, for validation."""
    n_q, bs, dim = q.shape
    mnp = k.shape[0]
    dh = dim // nh
    w1, b1, w2, b2, w3, b3 = params
    qb = jnp.transpose(q, (1, 0, 2))
    kb = jnp.transpose(k, (1, 0, 2))
    vb = jnp.transpose(v, (1, 0, 2))
    qp = (qb @ w1.T + b1).reshape(bs, n_q, nh, dh).transpose(0, 2, 1, 3)
    kp = (kb @ w2.T + b2).reshape(bs, mnp, nh, dh).transpose(0, 2, 3, 1)
    vp = (vb @ w3.T + b3).reshape(bs, mnp, nh, dh).transpose(0, 2, 1, 3)
    w = (qp @ kp) / math.sqrt(dh)
    mask = (rns_indices[:, :, :, None] == jnp.arange(mnp)[None, None, None, :]).any(2)
    mask = mask.astype(w.dtype)[:, None, :, :]
    w = w * mask + (-1e9) * (1 - mask)
    w = jax.nn.softmax(w, axis=3)
    return (w @ vp).transpose(2, 0, 1, 3).reshape(n_q, bs, dim)


if __name__ == "__main__":
    # small shapes consistent with the module (dim lane-dense at 128)
    NP, MNP, BS, DIM, NH, TOPK = 8, 16, 4, 128, 4, 4

    key = jax.random.PRNGKey(0)
    kq, kk, kv, ki, k1, k2, k3, k4, k5, k6 = jax.random.split(key, 10)

    q = jax.random.normal(kq, (NP, BS, DIM), dtype=jnp.float32)
    k = jax.random.normal(kk, (MNP, BS, DIM), dtype=jnp.float32)
    v = jax.random.normal(kv, (MNP, BS, DIM), dtype=jnp.float32)
    rns_indices = jax.random.randint(ki, (BS, NP, TOPK), 0, MNP, dtype=jnp.int32)

    # deterministic parameter init (nn.Linear(dim, dim) x3: weight (dim, dim), bias (dim,))
    s = 1.0 / math.sqrt(DIM)
    params = (
        jax.random.uniform(k1, (DIM, DIM), jnp.float32, -s, s),
        jax.random.uniform(k2, (DIM,), jnp.float32, -s, s),
        jax.random.uniform(k3, (DIM, DIM), jnp.float32, -s, s),
        jax.random.uniform(k4, (DIM,), jnp.float32, -s, s),
        jax.random.uniform(k5, (DIM, DIM), jnp.float32, -s, s),
        jax.random.uniform(k6, (DIM,), jnp.float32, -s, s),
    )

    out = cross_attn(q, k, v, rns_indices, params, NH)
    out = jax.block_until_ready(out)

    ref = cross_attn_reference(q, k, v, rns_indices, params, NH)
    assert out.shape == (NP, BS, DIM), out.shape
    # bf16 MXU inputs with f32 accumulation: tolerance sized for bf16 input rounding.
    err = float(jnp.max(jnp.abs(out - ref)))
    assert jnp.allclose(out, ref, atol=3e-2, rtol=3e-2), err

    print("KERNEL_OK")
</pallas_src>

<mosaic_0001>
module attributes {stable_mosaic.version = 11 : i64} {
  func.func @cross_attn_kernel(%arg0: i32, %arg1: memref<4x8x4xi32, #tpu.memory_space<vmem>>, %arg2: memref<8x4x128xf32, #tpu.memory_space<vmem>>, %arg3: memref<16x4x128xf32, #tpu.memory_space<vmem>>, %arg4: memref<16x4x128xf32, #tpu.memory_space<vmem>>, %arg5: memref<128x128xf32, #tpu.memory_space<vmem>>, %arg6: memref<1x128xf32, #tpu.memory_space<vmem>>, %arg7: memref<128x128xf32, #tpu.memory_space<vmem>>, %arg8: memref<1x128xf32, #tpu.memory_space<vmem>>, %arg9: memref<128x128xf32, #tpu.memory_space<vmem>>, %arg10: memref<1x128xf32, #tpu.memory_space<vmem>>, %arg11: memref<8x4x128xf32, #tpu.memory_space<vmem>>) attributes {dimension_semantics = [#tpu.dimension_semantics<parallel>], iteration_bounds = array<i64: 1>, scalar_prefetch = 0 : i64, scratch_operands = 0 : i64, tpu.core_type = #tpu.core_type<tc>, window_params = [{transform_indices = @transform_0, window_bounds = array<i64: 4, 8, 4>}, {transform_indices = @transform_1, window_bounds = array<i64: 8, 4, 128>}, {transform_indices = @transform_2, window_bounds = array<i64: 16, 4, 128>}, {transform_indices = @transform_3, window_bounds = array<i64: 16, 4, 128>}, {pipeline_mode = #tpu.pipeline_mode<synchronous>, transform_indices = @transform_4, window_bounds = array<i64: 128, 128>}, {pipeline_mode = #tpu.pipeline_mode<synchronous>, transform_indices = @transform_5, window_bounds = array<i64: 1, 128>}, {pipeline_mode = #tpu.pipeline_mode<synchronous>, transform_indices = @transform_6, window_bounds = array<i64: 128, 128>}, {pipeline_mode = #tpu.pipeline_mode<synchronous>, transform_indices = @transform_7, window_bounds = array<i64: 1, 128>}, {pipeline_mode = #tpu.pipeline_mode<synchronous>, transform_indices = @transform_8, window_bounds = array<i64: 128, 128>}, {pipeline_mode = #tpu.pipeline_mode<synchronous>, transform_indices = @transform_9, window_bounds = array<i64: 1, 128>}, {transform_indices = @transform_10, window_bounds = array<i64: 8, 4, 128>}]} {
    %c0 = arith.constant 0 : index
    %c0_0 = arith.constant 0 : index
    %c0_1 = arith.constant 0 : index
    %0 = vector.load %arg2[%c0, %c0_0, %c0_1] : memref<8x4x128xf32, #tpu.memory_space<vmem>>, vector<8x4x128xf32>
    %1 = tpu.transpose %0, [1, 0, 2] : vector<8x4x128xf32> -> vector<4x8x128xf32>
    %c0_2 = arith.constant 0 : index
    %c0_3 = arith.constant 0 : index
    %c0_4 = arith.constant 0 : index
    %2 = vector.load %arg3[%c0_2, %c0_3, %c0_4] : memref<16x4x128xf32, #tpu.memory_space<vmem>>, vector<16x4x128xf32>
    %3 = tpu.transpose %2, [1, 0, 2] : vector<16x4x128xf32> -> vector<4x16x128xf32>
    %c0_5 = arith.constant 0 : index
    %c0_6 = arith.constant 0 : index
    %c0_7 = arith.constant 0 : index
    %4 = vector.load %arg4[%c0_5, %c0_6, %c0_7] : memref<16x4x128xf32, #tpu.memory_space<vmem>>, vector<16x4x128xf32>
    %5 = tpu.transpose %4, [1, 0, 2] : vector<16x4x128xf32> -> vector<4x16x128xf32>
    %6 = vector.shape_cast %1 : vector<4x8x128xf32> to vector<32x128xf32>
    %7 = arith.truncf %6 : vector<32x128xf32> to vector<32x128xbf16>
    %8 = vector.shape_cast %3 : vector<4x16x128xf32> to vector<64x128xf32>
    %9 = arith.truncf %8 : vector<64x128xf32> to vector<64x128xbf16>
    %10 = vector.shape_cast %5 : vector<4x16x128xf32> to vector<64x128xf32>
    %11 = arith.truncf %10 : vector<64x128xf32> to vector<64x128xbf16>
    %c0_8 = arith.constant 0 : index
    %c0_9 = arith.constant 0 : index
    %12 = vector.load %arg5[%c0_8, %c0_9] : memref<128x128xf32, #tpu.memory_space<vmem>>, vector<128x128xf32>
    %13 = arith.truncf %12 : vector<128x128xf32> to vector<128x128xbf16>
    %cst = arith.constant dense<0.000000e+00> : vector<32x128xf32>
    %14 = tpu.matmul %7, %13, %cst {dimension_numbers = #tpu.dot_dimension_numbers<[1], [0], [0], [1], [0, 0, 1, 1], [], []>} : vector<32x128xbf16>, vector<128x128xbf16>, vector<32x128xf32> -> vector<32x128xf32>
    %c0_10 = arith.constant 0 : index
    %c0_11 = arith.constant 0 : index
    %15 = vector.load %arg6[%c0_10, %c0_11] : memref<1x128xf32, #tpu.memory_space<vmem>>, vector<1x128xf32>
    %16 = vector.broadcast %15 : vector<1x128xf32> to vector<32x128xf32>
    %17 = arith.addf %14, %16 : vector<32x128xf32>
    %c0_12 = arith.constant 0 : index
    %c0_13 = arith.constant 0 : index
    %18 = vector.load %arg7[%c0_12, %c0_13] : memref<128x128xf32, #tpu.memory_space<vmem>>, vector<128x128xf32>
    %19 = arith.truncf %18 : vector<128x128xf32> to vector<128x128xbf16>
    %cst_14 = arith.constant dense<0.000000e+00> : vector<64x128xf32>
    %20 = tpu.matmul %9, %19, %cst_14 {dimension_numbers = #tpu.dot_dimension_numbers<[1], [0], [0], [1], [0, 0, 1, 1], [], []>} : vector<64x128xbf16>, vector<128x128xbf16>, vector<64x128xf32> -> vector<64x128xf32>
    %c0_15 = arith.constant 0 : index
    %c0_16 = arith.constant 0 : index
    %21 = vector.load %arg8[%c0_15, %c0_16] : memref<1x128xf32, #tpu.memory_space<vmem>>, vector<1x128xf32>
    %22 = vector.broadcast %21 : vector<1x128xf32> to vector<64x128xf32>
    %23 = arith.addf %20, %22 : vector<64x128xf32>
    %c0_17 = arith.constant 0 : index
    %c0_18 = arith.constant 0 : index
    %24 = vector.load %arg9[%c0_17, %c0_18] : memref<128x128xf32, #tpu.memory_space<vmem>>, vector<128x128xf32>
    %25 = arith.truncf %24 : vector<128x128xf32> to vector<128x128xbf16>
    %cst_19 = arith.constant dense<0.000000e+00> : vector<64x128xf32>
    %26 = tpu.matmul %11, %25, %cst_19 {dimension_numbers = #tpu.dot_dimension_numbers<[1], [0], [0], [1], [0, 0, 1, 1], [], []>} : vector<64x128xbf16>, vector<128x128xbf16>, vector<64x128xf32> -> vector<64x128xf32>
    %c0_20 = arith.constant 0 : index
    %c0_21 = arith.constant 0 : index
    %27 = vector.load %arg10[%c0_20, %c0_21] : memref<1x128xf32, #tpu.memory_space<vmem>>, vector<1x128xf32>
    %28 = vector.broadcast %27 : vector<1x128xf32> to vector<64x128xf32>
    %29 = arith.addf %26, %28 : vector<64x128xf32>
    %30 = arith.truncf %17 : vector<32x128xf32> to vector<32x128xbf16>
    %31 = arith.truncf %23 : vector<64x128xf32> to vector<64x128xbf16>
    %32 = arith.truncf %29 : vector<64x128xf32> to vector<64x128xbf16>
    %c0_22 = arith.constant 0 : index
    %c0_23 = arith.constant 0 : index
    %c0_24 = arith.constant 0 : index
    %33 = vector.load %arg1[%c0_22, %c0_23, %c0_24] : memref<4x8x4xi32, #tpu.memory_space<vmem>>, vector<4x8x4xi32>
    %34 = tpu.iota {dimensions = array<i32: 2>} : vector<4x8x16xi32>
    %35 = vector.extract_strided_slice %33 {offsets = [0, 0, 0], sizes = [4, 8, 1], strides = [1, 1, 1]} : vector<4x8x4xi32> to vector<4x8x1xi32>
    %36 = vector.broadcast %35 : vector<4x8x1xi32> to vector<4x8x16xi32>
    %37 = arith.cmpi eq, %34, %36 : vector<4x8x16xi32>
    %38 = vector.extract_strided_slice %33 {offsets = [0, 0, 1], sizes = [4, 8, 1], strides = [1, 1, 1]} : vector<4x8x4xi32> to vector<4x8x1xi32>
    %39 = vector.broadcast %38 : vector<4x8x1xi32> to vector<4x8x16xi32>
    %40 = arith.cmpi eq, %34, %39 : vector<4x8x16xi32>
    %41 = arith.ori %37, %40 : vector<4x8x16xi1>
    %42 = vector.extract_strided_slice %33 {offsets = [0, 0, 2], sizes = [4, 8, 1], strides = [1, 1, 1]} : vector<4x8x4xi32> to vector<4x8x1xi32>
    %43 = vector.broadcast %42 : vector<4x8x1xi32> to vector<4x8x16xi32>
    %44 = arith.cmpi eq, %34, %43 : vector<4x8x16xi32>
    %45 = arith.ori %41, %44 : vector<4x8x16xi1>
    %46 = vector.extract_strided_slice %33 {offsets = [0, 0, 3], sizes = [4, 8, 1], strides = [1, 1, 1]} : vector<4x8x4xi32> to vector<4x8x1xi32>
    %47 = vector.broadcast %46 : vector<4x8x1xi32> to vector<4x8x16xi32>
    %48 = arith.cmpi eq, %34, %47 : vector<4x8x16xi32>
    %49 = arith.ori %45, %48 : vector<4x8x16xi1>
    %50 = vector.extract_strided_slice %30 {offsets = [0, 0], sizes = [32, 32], strides = [1, 1]} : vector<32x128xbf16> to vector<32x32xbf16>
    %51 = vector.shape_cast %50 : vector<32x32xbf16> to vector<4x8x32xbf16>
    %52 = vector.extract_strided_slice %31 {offsets = [0, 0], sizes = [64, 32], strides = [1, 1]} : vector<64x128xbf16> to vector<64x32xbf16>
    %53 = vector.shape_cast %52 : vector<64x32xbf16> to vector<4x16x32xbf16>
    %54 = vector.extract_strided_slice %32 {offsets = [0, 0], sizes = [64, 32], strides = [1, 1]} : vector<64x128xbf16> to vector<64x32xbf16>
    %55 = vector.shape_cast %54 : vector<64x32xbf16> to vector<4x16x32xbf16>
    "tpu.trace_start"() <{level = 10 : i32, message = "bqd,bkd->bqk"}> : () -> ()
    %cst_25 = arith.constant dense<0.000000e+00> : vector<4x8x16xf32>
    %56 = tpu.matmul %51, %53, %cst_25 {dimension_numbers = #tpu.dot_dimension_numbers<[2], [2], [1], [1], [0, 0, 0, 1, 1, 1], [0], [0]>} : vector<4x8x32xbf16>, vector<4x16x32xbf16>, vector<4x8x16xf32> -> vector<4x8x16xf32>
    %cst_26 = arith.constant -1.000000e+09 : f32
    "tpu.trace_stop"() : () -> ()
    %57 = vector.broadcast %cst_26 : f32 to vector<4x8x16xf32>
    %58 = arith.select %49, %56, %57 : vector<4x8x16xi1>, vector<4x8x16xf32>
    %cst_27 = arith.constant dense<0xFF800000> : vector<4x8xf32>
    %59 = vector.multi_reduction <maximumf>, %58, %cst_27 [2] : vector<4x8x16xf32> to vector<4x8xf32>
    %60 = vector.shape_cast %59 : vector<4x8xf32> to vector<4x8x1xf32>
    %61 = vector.broadcast %60 : vector<4x8x1xf32> to vector<4x8x16xf32>
    %62 = arith.subf %58, %61 : vector<4x8x16xf32>
    %63 = math.exp %62 : vector<4x8x16xf32>
    %cst_28 = arith.constant dense<0.000000e+00> : vector<4x8xf32>
    %64 = vector.multi_reduction <add>, %63, %cst_28 [2] : vector<4x8x16xf32> to vector<4x8xf32>
    %65 = vector.shape_cast %64 : vector<4x8xf32> to vector<4x8x1xf32>
    %66 = tpu.reciprocal %65 {approx = true} : vector<4x8x1xf32> -> vector<4x8x1xf32>
    %67 = arith.mulf %65, %66 : vector<4x8x1xf32>
    %cst_29 = arith.constant 2.000000e+00 : f32
    %68 = vector.broadcast %cst_29 : f32 to vector<4x8x1xf32>
    %69 = arith.subf %68, %67 : vector<4x8x1xf32>
    %70 = arith.mulf %66, %69 : vector<4x8x1xf32>
    %71 = vector.broadcast %70 : vector<4x8x1xf32> to vector<4x8x16xf32>
    %72 = arith.mulf %63, %71 : vector<4x8x16xf32>
    %73 = arith.truncf %72 : vector<4x8x16xf32> to vector<4x8x16xbf16>
    "tpu.trace_start"() <{level = 10 : i32, message = "bqk,bkd->bqd"}> : () -> ()
    %cst_30 = arith.constant dense<0.000000e+00> : vector<4x8x32xf32>
    %74 = tpu.matmul %73, %55, %cst_30 {dimension_numbers = #tpu.dot_dimension_numbers<[2], [1], [1], [2], [0, 0, 0, 1, 1, 2], [0], [0]>} : vector<4x8x16xbf16>, vector<4x16x32xbf16>, vector<4x8x32xf32> -> vector<4x8x32xf32>
    "tpu.trace_stop"() : () -> ()
    %75 = vector.extract_strided_slice %30 {offsets = [0, 32], sizes = [32, 32], strides = [1, 1]} : vector<32x128xbf16> to vector<32x32xbf16>
    %76 = vector.shape_cast %75 : vector<32x32xbf16> to vector<4x8x32xbf16>
    %77 = vector.extract_strided_slice %31 {offsets = [0, 32], sizes = [64, 32], strides = [1, 1]} : vector<64x128xbf16> to vector<64x32xbf16>
    %78 = vector.shape_cast %77 : vector<64x32xbf16> to vector<4x16x32xbf16>
    %79 = vector.extract_strided_slice %32 {offsets = [0, 32], sizes = [64, 32], strides = [1, 1]} : vector<64x128xbf16> to vector<64x32xbf16>
    %80 = vector.shape_cast %79 : vector<64x32xbf16> to vector<4x16x32xbf16>
    "tpu.trace_start"() <{level = 10 : i32, message = "bqd,bkd->bqk"}> : () -> ()
    %cst_31 = arith.constant dense<0.000000e+00> : vector<4x8x16xf32>
    %81 = tpu.matmul %76, %78, %cst_31 {dimension_numbers = #tpu.dot_dimension_numbers<[2], [2], [1], [1], [0, 0, 0, 1, 1, 1], [0], [0]>} : vector<4x8x32xbf16>, vector<4x16x32xbf16>, vector<4x8x16xf32> -> vector<4x8x16xf32>
    %cst_32 = arith.constant -1.000000e+09 : f32
    "tpu.trace_stop"() : () -> ()
    %82 = vector.broadcast %cst_32 : f32 to vector<4x8x16xf32>
    %83 = arith.select %49, %81, %82 : vector<4x8x16xi1>, vector<4x8x16xf32>
    %cst_33 = arith.constant dense<0xFF800000> : vector<4x8xf32>
    %84 = vector.multi_reduction <maximumf>, %83, %cst_33 [2] : vector<4x8x16xf32> to vector<4x8xf32>
    %85 = vector.shape_cast %84 : vector<4x8xf32> to vector<4x8x1xf32>
    %86 = vector.broadcast %85 : vector<4x8x1xf32> to vector<4x8x16xf32>
    %87 = arith.subf %83, %86 : vector<4x8x16xf32>
    %88 = math.exp %87 : vector<4x8x16xf32>
    %cst_34 = arith.constant dense<0.000000e+00> : vector<4x8xf32>
    %89 = vector.multi_reduction <add>, %88, %cst_34 [2] : vector<4x8x16xf32> to vector<4x8xf32>
    %90 = vector.shape_cast %89 : vector<4x8xf32> to vector<4x8x1xf32>
    %91 = tpu.reciprocal %90 {approx = true} : vector<4x8x1xf32> -> vector<4x8x1xf32>
    %92 = arith.mulf %90, %91 : vector<4x8x1xf32>
    %cst_35 = arith.constant 2.000000e+00 : f32
    %93 = vector.broadcast %cst_35 : f32 to vector<4x8x1xf32>
    %94 = arith.subf %93, %92 : vector<4x8x1xf32>
    %95 = arith.mulf %91, %94 : vector<4x8x1xf32>
    %96 = vector.broadcast %95 : vector<4x8x1xf32> to vector<4x8x16xf32>
    %97 = arith.mulf %88, %96 : vector<4x8x16xf32>
    %98 = arith.truncf %97 : vector<4x8x16xf32> to vector<4x8x16xbf16>
    "tpu.trace_start"() <{level = 10 : i32, message = "bqk,bkd->bqd"}> : () -> ()
    %cst_36 = arith.constant dense<0.000000e+00> : vector<4x8x32xf32>
    %99 = tpu.matmul %98, %80, %cst_36 {dimension_numbers = #tpu.dot_dimension_numbers<[2], [1], [1], [2], [0, 0, 0, 1, 1, 2], [0], [0]>} : vector<4x8x16xbf16>, vector<4x16x32xbf16>, vector<4x8x32xf32> -> vector<4x8x32xf32>
    "tpu.trace_stop"() : () -> ()
    %100 = vector.extract_strided_slice %30 {offsets = [0, 64], sizes = [32, 32], strides = [1, 1]} : vector<32x128xbf16> to vector<32x32xbf16>
    %101 = vector.shape_cast %100 : vector<32x32xbf16> to vector<4x8x32xbf16>
    %102 = vector.extract_strided_slice %31 {offsets = [0, 64], sizes = [64, 32], strides = [1, 1]} : vector<64x128xbf16> to vector<64x32xbf16>
    %103 = vector.shape_cast %102 : vector<64x32xbf16> to vector<4x16x32xbf16>
    %104 = vector.extract_strided_slice %32 {offsets = [0, 64], sizes = [64, 32], strides = [1, 1]} : vector<64x128xbf16> to vector<64x32xbf16>
    %105 = vector.shape_cast %104 : vector<64x32xbf16> to vector<4x16x32xbf16>
    "tpu.trace_start"() <{level = 10 : i32, message = "bqd,bkd->bqk"}> : () -> ()
    %cst_37 = arith.constant dense<0.000000e+00> : vector<4x8x16xf32>
    %106 = tpu.matmul %101, %103, %cst_37 {dimension_numbers = #tpu.dot_dimension_numbers<[2], [2], [1], [1], [0, 0, 0, 1, 1, 1], [0], [0]>} : vector<4x8x32xbf16>, vector<4x16x32xbf16>, vector<4x8x16xf32> -> vector<4x8x16xf32>
    %cst_38 = arith.constant -1.000000e+09 : f32
    "tpu.trace_stop"() : () -> ()
    %107 = vector.broadcast %cst_38 : f32 to vector<4x8x16xf32>
    %108 = arith.select %49, %106, %107 : vector<4x8x16xi1>, vector<4x8x16xf32>
    %cst_39 = arith.constant dense<0xFF800000> : vector<4x8xf32>
    %109 = vector.multi_reduction <maximumf>, %108, %cst_39 [2] : vector<4x8x16xf32> to vector<4x8xf32>
    %110 = vector.shape_cast %109 : vector<4x8xf32> to vector<4x8x1xf32>
    %111 = vector.broadcast %110 : vector<4x8x1xf32> to vector<4x8x16xf32>
    %112 = arith.subf %108, %111 : vector<4x8x16xf32>
    %113 = math.exp %112 : vector<4x8x16xf32>
    %cst_40 = arith.constant dense<0.000000e+00> : vector<4x8xf32>
    %114 = vector.multi_reduction <add>, %113, %cst_40 [2] : vector<4x8x16xf32> to vector<4x8xf32>
    %115 = vector.shape_cast %114 : vector<4x8xf32> to vector<4x8x1xf32>
    %116 = tpu.reciprocal %115 {approx = true} : vector<4x8x1xf32> -> vector<4x8x1xf32>
    %117 = arith.mulf %115, %116 : vector<4x8x1xf32>
    %cst_41 = arith.constant 2.000000e+00 : f32
    %118 = vector.broadcast %cst_41 : f32 to vector<4x8x1xf32>
    %119 = arith.subf %118, %117 : vector<4x8x1xf32>
    %120 = arith.mulf %116, %119 : vector<4x8x1xf32>
    %121 = vector.broadcast %120 : vector<4x8x1xf32> to vector<4x8x16xf32>
    %122 = arith.mulf %113, %121 : vector<4x8x16xf32>
    %123 = arith.truncf %122 : vector<4x8x16xf32> to vector<4x8x16xbf16>
    "tpu.trace_start"() <{level = 10 : i32, message = "bqk,bkd->bqd"}> : () -> ()
    %cst_42 = arith.constant dense<0.000000e+00> : vector<4x8x32xf32>
    %124 = tpu.matmul %123, %105, %cst_42 {dimension_numbers = #tpu.dot_dimension_numbers<[2], [1], [1], [2], [0, 0, 0, 1, 1, 2], [0], [0]>} : vector<4x8x16xbf16>, vector<4x16x32xbf16>, vector<4x8x32xf32> -> vector<4x8x32xf32>
    "tpu.trace_stop"() : () -> ()
    %125 = vector.extract_strided_slice %30 {offsets = [0, 96], sizes = [32, 32], strides = [1, 1]} : vector<32x128xbf16> to vector<32x32xbf16>
    %126 = vector.shape_cast %125 : vector<32x32xbf16> to vector<4x8x32xbf16>
    %127 = vector.extract_strided_slice %31 {offsets = [0, 96], sizes = [64, 32], strides = [1, 1]} : vector<64x128xbf16> to vector<64x32xbf16>
    %128 = vector.shape_cast %127 : vector<64x32xbf16> to vector<4x16x32xbf16>
    %129 = vector.extract_strided_slice %32 {offsets = [0, 96], sizes = [64, 32], strides = [1, 1]} : vector<64x128xbf16> to vector<64x32xbf16>
    %130 = vector.shape_cast %129 : vector<64x32xbf16> to vector<4x16x32xbf16>
    "tpu.trace_start"() <{level = 10 : i32, message = "bqd,bkd->bqk"}> : () -> ()
    %cst_43 = arith.constant dense<0.000000e+00> : vector<4x8x16xf32>
    %131 = tpu.matmul %126, %128, %cst_43 {dimension_numbers = #tpu.dot_dimension_numbers<[2], [2], [1], [1], [0, 0, 0, 1, 1, 1], [0], [0]>} : vector<4x8x32xbf16>, vector<4x16x32xbf16>, vector<4x8x16xf32> -> vector<4x8x16xf32>
    %cst_44 = arith.constant -1.000000e+09 : f32
    "tpu.trace_stop"() : () -> ()
    %132 = vector.broadcast %cst_44 : f32 to vector<4x8x16xf32>
    %133 = arith.select %49, %131, %132 : vector<4x8x16xi1>, vector<4x8x16xf32>
    %cst_45 = arith.constant dense<0xFF800000> : vector<4x8xf32>
    %134 = vector.multi_reduction <maximumf>, %133, %cst_45 [2] : vector<4x8x16xf32> to vector<4x8xf32>
    %135 = vector.shape_cast %134 : vector<4x8xf32> to vector<4x8x1xf32>
    %136 = vector.broadcast %135 : vector<4x8x1xf32> to vector<4x8x16xf32>
    %137 = arith.subf %133, %136 : vector<4x8x16xf32>
    %138 = math.exp %137 : vector<4x8x16xf32>
    %cst_46 = arith.constant dense<0.000000e+00> : vector<4x8xf32>
    %139 = vector.multi_reduction <add>, %138, %cst_46 [2] : vector<4x8x16xf32> to vector<4x8xf32>
    %140 = vector.shape_cast %139 : vector<4x8xf32> to vector<4x8x1xf32>
    %141 = tpu.reciprocal %140 {approx = true} : vector<4x8x1xf32> -> vector<4x8x1xf32>
    %142 = arith.mulf %140, %141 : vector<4x8x1xf32>
    %cst_47 = arith.constant 2.000000e+00 : f32
    %143 = vector.broadcast %cst_47 : f32 to vector<4x8x1xf32>
    %144 = arith.subf %143, %142 : vector<4x8x1xf32>
    %145 = arith.mulf %141, %144 : vector<4x8x1xf32>
    %146 = vector.broadcast %145 : vector<4x8x1xf32> to vector<4x8x16xf32>
    %147 = arith.mulf %138, %146 : vector<4x8x16xf32>
    %148 = arith.truncf %147 : vector<4x8x16xf32> to vector<4x8x16xbf16>
    "tpu.trace_start"() <{level = 10 : i32, message = "bqk,bkd->bqd"}> : () -> ()
    %cst_48 = arith.constant dense<0.000000e+00> : vector<4x8x32xf32>
    %149 = tpu.matmul %148, %130, %cst_48 {dimension_numbers = #tpu.dot_dimension_numbers<[2], [1], [1], [2], [0, 0, 0, 1, 1, 2], [0], [0]>} : vector<4x8x16xbf16>, vector<4x16x32xbf16>, vector<4x8x32xf32> -> vector<4x8x32xf32>
    "tpu.trace_stop"() : () -> ()
    %150 = tpu.concatenate %74, %99, %124, %149 in 2 : vector<4x8x32xf32>, vector<4x8x32xf32>, vector<4x8x32xf32>, vector<4x8x32xf32> -> vector<4x8x128xf32>
    %151 = tpu.transpose %150, [1, 0, 2] : vector<4x8x128xf32> -> vector<8x4x128xf32>
    %c0_49 = arith.constant 0 : index
    %c0_50 = arith.constant 0 : index
    %c0_51 = arith.constant 0 : index
    %152 = vector.load %arg11[%c0_49, %c0_50, %c0_51] : memref<8x4x128xf32, #tpu.memory_space<vmem>>, vector<8x4x128xf32>
    tpu.vector_store %arg11[%c0_49, %c0_50, %c0_51], %151 {strides = array<i32>} : memref<8x4x128xf32, #tpu.memory_space<vmem>>, vector<8x4x128xf32>,
    return
  }
  func.func @transform_0(%arg0: i32) -> (i32, i32, i32) {
    %c0_i32 = arith.constant 0 : i32
    %c0_i32_0 = arith.constant 0 : i32
    %c0_i32_1 = arith.constant 0 : i32
    return %arg0, %c0_i32, %c0_i32_0 : i32, i32, i32
  }
  func.func @transform_1(%arg0: i32) -> (i32, i32, i32) {
    %c0_i32 = arith.constant 0 : i32
    %c0_i32_0 = arith.constant 0 : i32
    %c0_i32_1 = arith.constant 0 : i32
    return %c0_i32, %arg0, %c0_i32_0 : i32, i32, i32
  }
  func.func @transform_2(%arg0: i32) -> (i32, i32, i32) {
    %c0_i32 = arith.constant 0 : i32
    %c0_i32_0 = arith.constant 0 : i32
    %c0_i32_1 = arith.constant 0 : i32
    return %c0_i32, %arg0, %c0_i32_0 : i32, i32, i32
  }
  func.func @transform_3(%arg0: i32) -> (i32, i32, i32) {
    %c0_i32 = arith.constant 0 : i32
    %c0_i32_0 = arith.constant 0 : i32
    %c0_i32_1 = arith.constant 0 : i32
    return %c0_i32, %arg0, %c0_i32_0 : i32, i32, i32
  }
  func.func @transform_4(%arg0: i32) -> (i32, i32) {
    %c0_i32 = arith.constant 0 : i32
    %c0_i32_0 = arith.constant 0 : i32
    %c0_i32_1 = arith.constant 0 : i32
    return %c0_i32, %c0_i32_0 : i32, i32
  }
  func.func @transform_5(%arg0: i32) -> (i32, i32) {
    %c0_i32 = arith.constant 0 : i32
    %c0_i32_0 = arith.constant 0 : i32
    %c0_i32_1 = arith.constant 0 : i32
    return %c0_i32, %c0_i32_0 : i32, i32
  }
  func.func @transform_6(%arg0: i32) -> (i32, i32) {
    %c0_i32 = arith.constant 0 : i32
    %c0_i32_0 = arith.constant 0 : i32
    %c0_i32_1 = arith.constant 0 : i32
    return %c0_i32, %c0_i32_0 : i32, i32
  }
  func.func @transform_7(%arg0: i32) -> (i32, i32) {
    %c0_i32 = arith.constant 0 : i32
    %c0_i32_0 = arith.constant 0 : i32
    %c0_i32_1 = arith.constant 0 : i32
    return %c0_i32, %c0_i32_0 : i32, i32
  }
  func.func @transform_8(%arg0: i32) -> (i32, i32) {
    %c0_i32 = arith.constant 0 : i32
    %c0_i32_0 = arith.constant 0 : i32
    %c0_i32_1 = arith.constant 0 : i32
    return %c0_i32, %c0_i32_0 : i32, i32
  }
  func.func @transform_9(%arg0: i32) -> (i32, i32) {
    %c0_i32 = arith.constant 0 : i32
    %c0_i32_0 = arith.constant 0 : i32
    %c0_i32_1 = arith.constant 0 : i32
    return %c0_i32, %c0_i32_0 : i32, i32
  }
  func.func @transform_10(%arg0: i32) -> (i32, i32, i32) {
    %c0_i32 = arith.constant 0 : i32
    %c0_i32_0 = arith.constant 0 : i32
    %c0_i32_1 = arith.constant 0 : i32
    return %c0_i32, %arg0, %c0_i32_0 : i32, i32, i32
  }
}

</mosaic_0001>

<llo_original>
// kernel: tpu_custom_call.1
$region0: #{tpu_custom_call.1}
  #allocation0 [shape = 'u32[]', space=smem, size = 0x4, offset = 0x4, fixed_abs, tag = 'smem constant byte address 0x4 - core index']
  #allocation1 [shape = 'u32[72,128]{1,0:T(1,128)}', space=vmem, size = 0x9000, scoped, tag = 'internal scratch']
  %s0 = inlined_call_operand.vmem [shape: s32[4,8,4], index: 0, kind: input, shape index: {}]
  %s1 = inlined_call_operand.vmem [shape: f32[8,4,128], index: 1, kind: input, shape index: {}]
  %s2 = inlined_call_operand.hbm [shape: f32[16,4,128], index: 2, kind: input, shape index: {}]
  %s3 = inlined_call_operand.hbm [shape: f32[16,4,128], index: 3, kind: input, shape index: {}]
  %s4 = inlined_call_operand.hbm [shape: f32[128,128], index: 4, kind: input, shape index: {}]
  %s5 = inlined_call_operand.vmem [shape: f32[1,128], index: 5, kind: input, shape index: {}]
  %s6 = inlined_call_operand.hbm [shape: f32[128,128], index: 6, kind: input, shape index: {}]
  %s7 = inlined_call_operand.vmem [shape: f32[1,128], index: 7, kind: input, shape index: {}]
  %s8 = inlined_call_operand.hbm [shape: f32[128,128], index: 8, kind: input, shape index: {}]
  %s9 = inlined_call_operand.vmem [shape: f32[1,128], index: 9, kind: input, shape index: {}]
  %s10 = inlined_call_operand.hbm [shape: f32[8,4,128], index: 10, kind: output, shape index: {}]
  %s11 = sld [smem:[#allocation0]]
  $region70: #{tpu_custom_call.1} parent=0
    _
  %s13 = ssub.s32 1, %s11
  %s14 = scalar_select 0, %s13, %s11
  $region1: #{tpu_custom_call.1} parent=0
    #allocation2 [shape = 'u8[32768]{0}', space=vmem, size = 0x8000, scoped, tag = 'input window, operand 2, single buffered']
    #allocation3 [shape = 's32[1]{0}', space=sflag, size = 0x4, scoped, tag = 'scoped memory for tpu_custom_call.1']
    #allocation4 [shape = 's32[1]{0}', space=sflag, size = 0x4, scoped, tag = 'scoped memory for tpu_custom_call.1']
    #allocation5 [shape = 'u8[32768]{0}', space=vmem, size = 0x8000, scoped, tag = 'input window, operand 3, single buffered']
    #allocation6 [shape = 's32[1]{0}', space=sflag, size = 0x4, scoped, tag = 'scoped memory for tpu_custom_call.1']
    #allocation7 [shape = 'u8[65536]{0}', space=vmem, size = 0x10000, scoped, tag = 'input window, operand 4, single buffered']
    #allocation8 [shape = 'u8[65536]{0}', space=vmem, size = 0x10000, scoped, tag = 'input window, operand 6, single buffered']
    #allocation9 [shape = 's32[1]{0}', space=sflag, size = 0x4, scoped, tag = 'scoped memory for tpu_custom_call.1']
    #allocation10 [shape = 'u8[65536]{0}', space=vmem, size = 0x10000, scoped, tag = 'input window, operand 8, single buffered']
    #allocation11 [shape = 'u8[16384]{0}', space=vmem, size = 0x4000, scoped, tag = 'output window, operand 0, single buffered']
    %15 = vsyncpa [#allocation3], 0
    %16 = vsyncpa [#allocation6], 0
    %17 = vsyncpa [#allocation9], 0
    %18 = vsyncpa [#allocation4], 0
    // Predicated region
    $region2: #{tpu_custom_call.1} parent=1 // pred_check
      _
    $region3: #{tpu_custom_call.1} parent=1 // pred_check_branch
      %20 = sbr.rel (0) target = $region5
    $region4: #{tpu_custom_call.1} parent=1 // pred_region
      _
    $region5: #{tpu_custom_call.1} parent=1 // pred_fallthru
      _
    // Predicated region
    $region6: #{tpu_custom_call.1} parent=1 // pred_check
      _
    $region7: #{tpu_custom_call.1} parent=1 // pred_check_branch
      %22 = sbr.rel (0) target = $region9
    $region8: #{tpu_custom_call.1} parent=1 // pred_region
      _
    $region9: #{tpu_custom_call.1} parent=1 // pred_fallthru
      _
    // Predicated region
    $region10: #{tpu_custom_call.1} parent=1 // pred_check
      _
    $region11: #{tpu_custom_call.1} parent=1 // pred_check_branch
      %24 = sbr.rel (0) target = $region13
    $region12: #{tpu_custom_call.1} parent=1 // pred_region
      %26 = vsyncadd [#allocation3], 0
      %s27 = sshll.u32 %s2, 4
      %s28 = int_to_ptr.hbm [resolvable:$true] %s27
      %s29 = sshll.u32 [#allocation2], 4
      %s30 = int_to_ptr.vmem [resolvable:$true] %s29
      %35 = dma.hbm_to_vmem [thread:$0]  %s28, 1024, %s30, [#allocation3], 64, 64, 4
    $region13: #{tpu_custom_call.1} parent=1 // pred_fallthru
      _
    // Predicated region
    $region14: #{tpu_custom_call.1} parent=1 // pred_check
      _
    $region15: #{tpu_custom_call.1} parent=1 // pred_check_branch
      %37 = sbr.rel (0) target = $region17
    $region16: #{tpu_custom_call.1} parent=1 // pred_region
      %39 = vsyncadd [#allocation6], 0
      %s40 = sshll.u32 %s3, 4
      %s41 = int_to_ptr.hbm [resolvable:$true] %s40
      %s42 = sshll.u32 [#allocation5], 4
      %s43 = int_to_ptr.vmem [resolvable:$true] %s42
      %48 = dma.hbm_to_vmem [thread:$0]  %s41, 1024, %s43, [#allocation6], 64, 64, 4
    $region17: #{tpu_custom_call.1} parent=1 // pred_fallthru
      _
    // Predicated region
    $region18: #{tpu_custom_call.1} parent=1 // pred_check
      _
    $region19: #{tpu_custom_call.1} parent=1 // pred_check_branch
      %50 = sbr.rel (0) target = $region21
    $region20: #{tpu_custom_call.1} parent=1 // pred_region
      %52 = vsyncadd [#allocation6], 0
      %s53 = sshll.u32 %s4, 4
      %s54 = int_to_ptr.hbm [resolvable:$true] %s53
      %s55 = sshll.u32 [#allocation7], 4
      %s56 = int_to_ptr.vmem [resolvable:$true] %s55
      %61 = dma.hbm_to_vmem [thread:$0]  %s54, 2048, %s56, [#allocation6], 128, 128, 8
    $region21: #{tpu_custom_call.1} parent=1 // pred_fallthru
      _
    // Predicated region
    $region22: #{tpu_custom_call.1} parent=1 // pred_check
      _
    $region23: #{tpu_custom_call.1} parent=1 // pred_check_branch
      %63 = sbr.rel (0) target = $region25
    $region24: #{tpu_custom_call.1} parent=1 // pred_region
      _
    $region25: #{tpu_custom_call.1} parent=1 // pred_fallthru
      _
    // Predicated region
    $region26: #{tpu_custom_call.1} parent=1 // pred_check
      _
    $region27: #{tpu_custom_call.1} parent=1 // pred_check_branch
      %65 = sbr.rel (0) target = $region29
    $region28: #{tpu_custom_call.1} parent=1 // pred_region
      %67 = vsyncadd [#allocation9], 0
      %s68 = sshll.u32 %s6, 4
      %s69 = int_to_ptr.hbm [resolvable:$true] %s68
      %s70 = sshll.u32 [#allocation8], 4
      %s71 = int_to_ptr.vmem [resolvable:$true] %s70
      %76 = dma.hbm_to_vmem [thread:$0]  %s69, 2048, %s71, [#allocation9], 128, 128, 8
    $region29: #{tpu_custom_call.1} parent=1 // pred_fallthru
      _
    // Predicated region
    $region30: #{tpu_custom_call.1} parent=1 // pred_check
      _
    $region31: #{tpu_custom_call.1} parent=1 // pred_check_branch
      %78 = sbr.rel (0) target = $region33
    $region32: #{tpu_custom_call.1} parent=1 // pred_region
      _
    $region33: #{tpu_custom_call.1} parent=1 // pred_fallthru
      _
    // Predicated region
    $region34: #{tpu_custom_call.1} parent=1 // pred_check
      _
    $region35: #{tpu_custom_call.1} parent=1 // pred_check_branch
      %80 = sbr.rel (0) target = $region37
    $region36: #{tpu_custom_call.1} parent=1 // pred_region
      %82 = vsyncadd [#allocation9], 0
      %s83 = sshll.u32 %s8, 4
      %s84 = int_to_ptr.hbm [resolvable:$true] %s83
      %s85 = sshll.u32 [#allocation10], 4
      %s86 = int_to_ptr.vmem [resolvable:$true] %s85
      %91 = dma.hbm_to_vmem [thread:$0]  %s84, 2048, %s86, [#allocation9], 128, 128, 8
    $region37: #{tpu_custom_call.1} parent=1 // pred_fallthru
      _
    // Predicated region
    $region38: #{tpu_custom_call.1} parent=1 // pred_check
      _
    $region39: #{tpu_custom_call.1} parent=1 // pred_check_branch
      %93 = sbr.rel (0) target = $region41
    $region40: #{tpu_custom_call.1} parent=1 // pred_region
      _
    $region41: #{tpu_custom_call.1} parent=1 // pred_fallthru
      _
    // Predicated region
    $region42: #{tpu_custom_call.1} parent=1 // pred_check
      _
    $region43: #{tpu_custom_call.1} parent=1 // pred_check_branch
      %95 = sbr.rel (0) target = $region45
    $region44: #{tpu_custom_call.1} parent=1 // pred_region
      %97 = dma.done [#allocation3], 1024
    $region45: #{tpu_custom_call.1} parent=1 // pred_fallthru
      _
    // Predicated region
    $region46: #{tpu_custom_call.1} parent=1 // pred_check
      _
    $region47: #{tpu_custom_call.1} parent=1 // pred_check_branch
      %99 = sbr.rel (0) target = $region49
    $region48: #{tpu_custom_call.1} parent=1 // pred_region
      %101 = dma.done [#allocation6], 1024
    $region49: #{tpu_custom_call.1} parent=1 // pred_fallthru
      _
    // Predicated region
    $region50: #{tpu_custom_call.1} parent=1 // pred_check
      _
    $region51: #{tpu_custom_call.1} parent=1 // pred_check_branch
      %103 = sbr.rel (0) target = $region53
    $region52: #{tpu_custom_call.1} parent=1 // pred_region
      %105 = dma.done [#allocation6], 2048
    $region53: #{tpu_custom_call.1} parent=1 // pred_fallthru
      _
    // Predicated region
    $region54: #{tpu_custom_call.1} parent=1 // pred_check
      _
    $region55: #{tpu_custom_call.1} parent=1 // pred_check_branch
      %107 = sbr.rel (0) target = $region57
    $region56: #{tpu_custom_call.1} parent=1 // pred_region
      %109 = dma.done [#allocation9], 2048
    $region57: #{tpu_custom_call.1} parent=1 // pred_fallthru
      _
    // Predicated region
    $region58: #{tpu_custom_call.1} parent=1 // pred_check
      _
    $region59: #{tpu_custom_call.1} parent=1 // pred_check_branch
      %111 = sbr.rel (0) target = $region61
    $region60: #{tpu_custom_call.1} parent=1 // pred_region
      %113 = dma.done [#allocation9], 2048
    $region61: #{tpu_custom_call.1} parent=1 // pred_fallthru
      _
    %v115 = vld [vmem:[%s1] sm:$0xf]
    %v116 = vld [vmem:[%s1 + $0x4] sm:$0xf]
    %v117 = vld [vmem:[%s1 + $0x8] sm:$0xf]
    %v118 = vld [vmem:[%s1 + $0xc] sm:$0xf]
    %v119 = vld [vmem:[%s1 + $0x10] sm:$0xf]
    %v120 = vld [vmem:[%s1 + $0x14] sm:$0xf]
    %v121 = vld [vmem:[%s1 + $0x18] sm:$0xf]
    %v122 = vld [vmem:[%s1 + $0x1c] sm:$0xf]
    %v123 = vrot.slane %v117, 4
    %vm124 = vcmask 1047556
    %v125 = vsel %vm124, %v123, %v115
    %v127 = vunpack.c.l.s4 1983009808
    %v128 = vunpack.c.0.s8 %v127
    %v129 = vperm.slane %v125, %v128
    %v130 = vrot.slane %v118, 4
    %v131 = vsel %vm124, %v130, %v116
    %v133 = vunpack.c.l.s4 1983009808
    %v134 = vunpack.c.0.s8 %v133
    %v135 = vperm.slane %v131, %v134
    %v136 = vrot.slane %v121, 4
    %v137 = vsel %vm124, %v136, %v119
    %v139 = vunpack.c.l.s4 1983009808
    %v140 = vunpack.c.0.s8 %v139
    %v141 = vperm.slane %v137, %v140
    %v142 = vrot.slane %v122, 4
    %v143 = vsel %vm124, %v142, %v120
    %v145 = vunpack.c.l.s4 1983009808
    %v146 = vunpack.c.0.s8 %v145
    %v147 = vperm.slane %v143, %v146
    %v148 = vrot.slane %v135, 4
    %v149 = vsel %vm124, %v148, %v129
    %v150 = vrot.slane %v129, 4
    %v151 = vsel %vm124, %v135, %v150
    %v153 = vunpack.c.l.s4 1934713408
    %v154 = vunpack.c.0.s8 %v153
    %v155 = vperm.slane %v149, %v154
    %v157 = vunpack.c.l.s4 1934713408
    %v158 = vunpack.c.0.s8 %v157
    %v159 = vperm.slane %v151, %v158
    %v160 = vrot.slane %v147, 4
    %v161 = vsel %vm124, %v160, %v141
    %v162 = vrot.slane %v141, 4
    %v163 = vsel %vm124, %v147, %v162
    %v165 = vunpack.c.l.s4 1934713408
    %v166 = vunpack.c.0.s8 %v165
    %v167 = vperm.slane %v161, %v166
    %v169 = vunpack.c.l.s4 1934713408
    %v170 = vunpack.c.0.s8 %v169
    %v171 = vperm.slane %v163, %v170
    %v172 = vrot.slane %v167, 4
    %v173 = vsel %vm124, %v172, %v155
    %v174 = vrot.slane %v155, 4
    %v175 = vsel %vm124, %v167, %v174
    %v176 = vrot.slane %v171, 4
    %v177 = vsel %vm124, %v176, %v159
    %v178 = vrot.slane %v159, 4
    %v179 = vsel %vm124, %v171, %v178
    %v180 = vld [vmem:[#allocation2] sm:$0xf]
    %v181 = vld [vmem:[#allocation2 + $0x4] sm:$0xf]
    %v182 = vld [vmem:[#allocation2 + $0x8] sm:$0xf]
    %v183 = vld [vmem:[#allocation2 + $0xc] sm:$0xf]
    %v184 = vld [vmem:[#allocation2 + $0x10] sm:$0xf]
    %v185 = vld [vmem:[#allocation2 + $0x14] sm:$0xf]
    %v186 = vld [vmem:[#allocation2 + $0x18] sm:$0xf]
    %v187 = vld [vmem:[#allocation2 + $0x1c] sm:$0xf]
    %v188 = vld [vmem:[#allocation2 + $0x20] sm:$0xf]
    %v189 = vld [vmem:[#allocation2 + $0x24] sm:$0xf]
    %v190 = vld [vmem:[#allocation2 + $0x28] sm:$0xf]
    %v191 = vld [vmem:[#allocation2 + $0x2c] sm:$0xf]
    %v192 = vld [vmem:[#allocation2 + $0x30] sm:$0xf]
    %v193 = vld [vmem:[#allocation2 + $0x34] sm:$0xf]
    %v194 = vld [vmem:[#allocation2 + $0x38] sm:$0xf]
    %v195 = vld [vmem:[#allocation2 + $0x3c] sm:$0xf]
    %v196 = vrot.slane %v182, 4
    %v197 = vsel %vm124, %v196, %v180
    %v199 = vunpack.c.l.s4 1983009808
    %v200 = vunpack.c.0.s8 %v199
    %v201 = vperm.slane %v197, %v200
    %v202 = vrot.slane %v183, 4
    %v203 = vsel %vm124, %v202, %v181
    %v205 = vunpack.c.l.s4 1983009808
    %v206 = vunpack.c.0.s8 %v205
    %v207 = vperm.slane %v203, %v206
    %v208 = vrot.slane %v186, 4
    %v209 = vsel %vm124, %v208, %v184
    %v211 = vunpack.c.l.s4 1983009808
    %v212 = vunpack.c.0.s8 %v211
    %v213 = vperm.slane %v209, %v212
    %v214 = vrot.slane %v187, 4
    %v215 = vsel %vm124, %v214, %v185
    %v217 = vunpack.c.l.s4 1983009808
    %v218 = vunpack.c.0.s8 %v217
    %v219 = vperm.slane %v215, %v218
    %v220 = vrot.slane %v207, 4
    %v221 = vsel %vm124, %v220, %v201
    %v222 = vrot.slane %v201, 4
    %v223 = vsel %vm124, %v207, %v222
    %v225 = vunpack.c.l.s4 1934713408
    %v226 = vunpack.c.0.s8 %v225
    %v227 = vperm.slane %v221, %v226
    %v229 = vunpack.c.l.s4 1934713408
    %v230 = vunpack.c.0.s8 %v229
    %v231 = vperm.slane %v223, %v230
    %v232 = vrot.slane %v219, 4
    %v233 = vsel %vm124, %v232, %v213
    %v234 = vrot.slane %v213, 4
    %v235 = vsel %vm124, %v219, %v234
    %v237 = vunpack.c.l.s4 1934713408
    %v238 = vunpack.c.0.s8 %v237
    %v239 = vperm.slane %v233, %v238
    %v241 = vunpack.c.l.s4 1934713408
    %v242 = vunpack.c.0.s8 %v241
    %v243 = vperm.slane %v235, %v242
    %v244 = vrot.slane %v239, 4
    %v245 = vsel %vm124, %v244, %v227
    %v246 = vrot.slane %v227, 4
    %v247 = vsel %vm124, %v239, %v246
    %v248 = vrot.slane %v243, 4
    %v249 = vsel %vm124, %v248, %v231
    %v250 = vrot.slane %v231, 4
    %v251 = vsel %vm124, %v243, %v250
    %v252 = vrot.slane %v190, 4
    %v253 = vsel %vm124, %v252, %v188
    %v255 = vunpack.c.l.s4 1983009808
    %v256 = vunpack.c.0.s8 %v255
    %v257 = vperm.slane %v253, %v256
    %v258 = vrot.slane %v191, 4
    %v259 = vsel %vm124, %v258, %v189
    %v261 = vunpack.c.l.s4 1983009808
    %v262 = vunpack.c.0.s8 %v261
    %v263 = vperm.slane %v259, %v262
    %v264 = vrot.slane %v194, 4
    %v265 = vsel %vm124, %v264, %v192
    %v267 = vunpack.c.l.s4 1983009808
    %v268 = vunpack.c.0.s8 %v267
    %v269 = vperm.slane %v265, %v268
    %v270 = vrot.slane %v195, 4
    %v271 = vsel %vm124, %v270, %v193
    %v273 = vunpack.c.l.s4 1983009808
    %v274 = vunpack.c.0.s8 %v273
    %v275 = vperm.slane %v271, %v274
    %v276 = vrot.slane %v263, 4
    %v277 = vsel %vm124, %v276, %v257
    %v278 = vrot.slane %v257, 4
    %v279 = vsel %vm124, %v263, %v278
    %v281 = vunpack.c.l.s4 1934713408
    %v282 = vunpack.c.0.s8 %v281
    %v283 = vperm.slane %v277, %v282
    %v285 = vunpack.c.l.s4 1934713408
    %v286 = vunpack.c.0.s8 %v285
    %v287 = vperm.slane %v279, %v286
    %v288 = vrot.slane %v275, 4
    %v289 = vsel %vm124, %v288, %v269
    %v290 = vrot.slane %v269, 4
    %v291 = vsel %vm124, %v275, %v290
    %v293 = vunpack.c.l.s4 1934713408
    %v294 = vunpack.c.0.s8 %v293
    %v295 = vperm.slane %v289, %v294
    %v297 = vunpack.c.l.s4 1934713408
    %v298 = vunpack.c.0.s8 %v297
    %v299 = vperm.slane %v291, %v298
    %v300 = vrot.slane %v295, 4
    %v301 = vsel %vm124, %v300, %v283
    %v302 = vrot.slane %v283, 4
    %v303 = vsel %vm124, %v295, %v302
    %v304 = vrot.slane %v299, 4
    %v305 = vsel %vm124, %v304, %v287
    %v306 = vrot.slane %v287, 4
    %v307 = vsel %vm124, %v299, %v306
    %v308 = vld [vmem:[#allocation5] sm:$0xf]
    %v309 = vld [vmem:[#allocation5 + $0x4] sm:$0xf]
    %v310 = vld [vmem:[#allocation5 + $0x8] sm:$0xf]
    %v311 = vld [vmem:[#allocation5 + $0xc] sm:$0xf]
    %v312 = vld [vmem:[#allocation5 + $0x10] sm:$0xf]
    %v313 = vld [vmem:[#allocation5 + $0x14] sm:$0xf]
    %v314 = vld [vmem:[#allocation5 + $0x18] sm:$0xf]
    %v315 = vld [vmem:[#allocation5 + $0x1c] sm:$0xf]
    %v316 = vld [vmem:[#allocation5 + $0x20] sm:$0xf]
    %v317 = vld [vmem:[#allocation5 + $0x24] sm:$0xf]
    %v318 = vld [vmem:[#allocation5 + $0x28] sm:$0xf]
    %v319 = vld [vmem:[#allocation5 + $0x2c] sm:$0xf]
    %v320 = vld [vmem:[#allocation5 + $0x30] sm:$0xf]
    %v321 = vld [vmem:[#allocation5 + $0x34] sm:$0xf]
    %v322 = vld [vmem:[#allocation5 + $0x38] sm:$0xf]
    %v323 = vld [vmem:[#allocation5 + $0x3c] sm:$0xf]
    %v324 = vrot.slane %v310, 4
    %v325 = vsel %vm124, %v324, %v308
    %v327 = vunpack.c.l.s4 1983009808
    %v328 = vunpack.c.0.s8 %v327
    %v329 = vperm.slane %v325, %v328
    %v330 = vrot.slane %v311, 4
    %v331 = vsel %vm124, %v330, %v309
    %v333 = vunpack.c.l.s4 1983009808
    %v334 = vunpack.c.0.s8 %v333
    %v335 = vperm.slane %v331, %v334
    %v336 = vrot.slane %v314, 4
    %v337 = vsel %vm124, %v336, %v312
    %v339 = vunpack.c.l.s4 1983009808
    %v340 = vunpack.c.0.s8 %v339
    %v341 = vperm.slane %v337, %v340
    %v342 = vrot.slane %v315, 4
    %v343 = vsel %vm124, %v342, %v313
    %v345 = vunpack.c.l.s4 1983009808
    %v346 = vunpack.c.0.s8 %v345
    %v347 = vperm.slane %v343, %v346
    %v348 = vrot.slane %v335, 4
    %v349 = vsel %vm124, %v348, %v329
    %v350 = vrot.slane %v329, 4
    %v351 = vsel %vm124, %v335, %v350
    %v353 = vunpack.c.l.s4 1934713408
    %v354 = vunpack.c.0.s8 %v353
    %v355 = vperm.slane %v349, %v354
    %v357 = vunpack.c.l.s4 1934713408
    %v358 = vunpack.c.0.s8 %v357
    %v359 = vperm.slane %v351, %v358
    %v360 = vrot.slane %v347, 4
    %v361 = vsel %vm124, %v360, %v341
    %v362 = vrot.slane %v341, 4
    %v363 = vsel %vm124, %v347, %v362
    %v365 = vunpack.c.l.s4 1934713408
    %v366 = vunpack.c.0.s8 %v365
    %v367 = vperm.slane %v361, %v366
    %v369 = vunpack.c.l.s4 1934713408
    %v370 = vunpack.c.0.s8 %v369
    %v371 = vperm.slane %v363, %v370
    %v372 = vrot.slane %v367, 4
    %v373 = vsel %vm124, %v372, %v355
    %v374 = vrot.slane %v355, 4
    %v375 = vsel %vm124, %v367, %v374
    %v376 = vrot.slane %v371, 4
    %v377 = vsel %vm124, %v376, %v359
    %v378 = vrot.slane %v359, 4
    %v379 = vsel %vm124, %v371, %v378
    %v380 = vrot.slane %v318, 4
    %v381 = vsel %vm124, %v380, %v316
    %v383 = vunpack.c.l.s4 1983009808
    %v384 = vunpack.c.0.s8 %v383
    %v385 = vperm.slane %v381, %v384
    %v386 = vrot.slane %v319, 4
    %v387 = vsel %vm124, %v386, %v317
    %v389 = vunpack.c.l.s4 1983009808
    %v390 = vunpack.c.0.s8 %v389
    %v391 = vperm.slane %v387, %v390
    %v392 = vrot.slane %v322, 4
    %v393 = vsel %vm124, %v392, %v320
    %v395 = vunpack.c.l.s4 1983009808
    %v396 = vunpack.c.0.s8 %v395
    %v397 = vperm.slane %v393, %v396
    %v398 = vrot.slane %v323, 4
    %v399 = vsel %vm124, %v398, %v321
    %v401 = vunpack.c.l.s4 1983009808
    %v402 = vunpack.c.0.s8 %v401
    %v403 = vperm.slane %v399, %v402
    %v404 = vrot.slane %v391, 4
    %v405 = vsel %vm124, %v404, %v385
    %v406 = vrot.slane %v385, 4
    %v407 = vsel %vm124, %v391, %v406
    %v409 = vunpack.c.l.s4 1934713408
    %v410 = vunpack.c.0.s8 %v409
    %v411 = vperm.slane %v405, %v410
    %v413 = vunpack.c.l.s4 1934713408
    %v414 = vunpack.c.0.s8 %v413
    %v415 = vperm.slane %v407, %v414
    %v416 = vrot.slane %v403, 4
    %v417 = vsel %vm124, %v416, %v397
    %v418 = vrot.slane %v397, 4
    %v419 = vsel %vm124, %v403, %v418
    %v421 = vunpack.c.l.s4 1934713408
    %v422 = vunpack.c.0.s8 %v421
    %v423 = vperm.slane %v417, %v422
    %v425 = vunpack.c.l.s4 1934713408
    %v426 = vunpack.c.0.s8 %v425
    %v427 = vperm.slane %v419, %v426
    %v428 = vrot.slane %v423, 4
    %v429 = vsel %vm124, %v428, %v411
    %v430 = vrot.slane %v411, 4
    %v431 = vsel %vm124, %v423, %v430
    %v432 = vrot.slane %v427, 4
    %v433 = vsel %vm124, %v432, %v415
    %v434 = vrot.slane %v415, 4
    %v435 = vsel %vm124, %v427, %v434
    %v436 = vpack.c.bf16 %v175, %v173
    %v437 = vpack.c.bf16 %v179, %v177
    %v438 = vpack.c.bf16 %v301, %v245
    %v439 = vpack.c.bf16 %v303, %v247
    %v440 = vpack.c.bf16 %v305, %v249
    %v441 = vpack.c.bf16 %v307, %v251
    %v442 = vpack.c.bf16 %v429, %v373
    %v443 = vpack.c.bf16 %v431, %v375
    %v444 = vpack.c.bf16 %v433, %v377
    %v445 = vpack.c.bf16 %v435, %v379
    %v446 = vld [vmem:[#allocation7] sm:$0xff]
    %v447 = vld [vmem:[#allocation7 + $0x8] sm:$0xff]
    %v448 = vld [vmem:[#allocation7 + $0x10] sm:$0xff]
    %v449 = vld [vmem:[#allocation7 + $0x18] sm:$0xff]
    %v450 = vld [vmem:[#allocation7 + $0x20] sm:$0xff]
    %v451 = vld [vmem:[#allocation7 + $0x28] sm:$0xff]
    %v452 = vld [vmem:[#allocation7 + $0x30] sm:$0xff]
    %v453 = vld [vmem:[#allocation7 + $0x38] sm:$0xff]
    %v454 = vld [vmem:[#allocation7 + $0x40] sm:$0xff]
    %v455 = vld [vmem:[#allocation7 + $0x48] sm:$0xff]
    %v456 = vld [vmem:[#allocation7 + $0x50] sm:$0xff]
    %v457 = vld [vmem:[#allocation7 + $0x58] sm:$0xff]
    %v458 = vld [vmem:[#allocation7 + $0x60] sm:$0xff]
    %v459 = vld [vmem:[#allocation7 + $0x68] sm:$0xff]
    %v460 = vld [vmem:[#allocation7 + $0x70] sm:$0xff]
    %v461 = vld [vmem:[#allocation7 + $0x78] sm:$0xff]
    %v462 = vpack.c.bf16 %v447, %v446
    %v463 = vpack.c.bf16 %v449, %v448
    %v464 = vpack.c.bf16 %v451, %v450
    %v465 = vpack.c.bf16 %v453, %v452
    %v466 = vpack.c.bf16 %v455, %v454
    %v467 = vpack.c.bf16 %v457, %v456
    %v468 = vpack.c.bf16 %v459, %v458
    %v469 = vpack.c.bf16 %v461, %v460
    %v470 = vld [vmem:[%s5] sm:$0x1]
    %v472 = vperm.slane %v470, 0
    %474 = vmatpush.bf16.msra.mxu0 %v469
    %475 = vmatpush.bf16.msra.mxu0 %v468
    %476 = vmatpush.bf16.msra.mxu0 %v467
    %477 = vmatpush.bf16.msra.mxu0 %v466
    %478 = vmatpush.bf16.msra.mxu0 %v465
    %479 = vmatpush.bf16.msra.mxu0 %v464
    %480 = vmatpush.bf16.msra.mxu0 %v463
    %481 = vmatpush.bf16.msra.mxu0 %v462
    %482 = vmatmul.bf16.gmra.mxu0 %v436
    %v483 = vpop.f32.mrf.mxu0
    %v484 = vadd.f32 %v472, %v483
    %v485 = vpop.f32.mrf.mxu0
    %v486 = vadd.f32 %v472, %v485
    %487 = vmatmul.bf16.gmra.mxu0 %v437
    %v488 = vpop.f32.mrf.mxu0
    %v489 = vadd.f32 %v472, %v488
    %v490 = vpop.f32.mrf.mxu0
    %v491 = vadd.f32 %v472, %v490
    %492 = vdwg.mxu0
    %v493 = vld [vmem:[#allocation8] sm:$0xff]
    %v494 = vld [vmem:[#allocation8 + $0x8] sm:$0xff]
    %v495 = vld [vmem:[#allocation8 + $0x10] sm:$0xff]
    %v496 = vld [vmem:[#allocation8 + $0x18] sm:$0xff]
    %v497 = vld [vmem:[#allocation8 + $0x20] sm:$0xff]
    %v498 = vld [vmem:[#allocation8 + $0x28] sm:$0xff]
    %v499 = vld [vmem:[#allocation8 + $0x30] sm:$0xff]
    %v500 = vld [vmem:[#allocation8 + $0x38] sm:$0xff]
    %v501 = vld [vmem:[#allocation8 + $0x40] sm:$0xff]
    %v502 = vld [vmem:[#allocation8 + $0x48] sm:$0xff]
    %v503 = vld [vmem:[#allocation8 + $0x50] sm:$0xff]
    %v504 = vld [vmem:[#allocation8 + $0x58] sm:$0xff]
    %v505 = vld [vmem:[#allocation8 + $0x60] sm:$0xff]
    %v506 = vld [vmem:[#allocation8 + $0x68] sm:$0xff]
    %v507 = vld [vmem:[#allocation8 + $0x70] sm:$0xff]
    %v508 = vld [vmem:[#allocation8 + $0x78] sm:$0xff]
    %v509 = vpack.c.bf16 %v494, %v493
    %v510 = vpack.c.bf16 %v496, %v495
    %v511 = vpack.c.bf16 %v498, %v497
    %v512 = vpack.c.bf16 %v500, %v499
    %v513 = vpack.c.bf16 %v502, %v501
    %v514 = vpack.c.bf16 %v504, %v503
    %v515 = vpack.c.bf16 %v506, %v505
    %v516 = vpack.c.bf16 %v508, %v507
    %v517 = vld [vmem:[%s7] sm:$0x1]
    %v519 = vperm.slane %v517, 0
    %521 = vmatpush.bf16.msra.mxu0 %v516
    %522 = vmatpush.bf16.msra.mxu0 %v515
    %523 = vmatpush.bf16.msra.mxu0 %v514
    %524 = vmatpush.bf16.msra.mxu0 %v513
    %525 = vmatpush.bf16.msra.mxu0 %v512
    %526 = vmatpush.bf16.msra.mxu0 %v511
    %527 = vmatpush.bf16.msra.mxu0 %v510
    %528 = vmatpush.bf16.msra.mxu0 %v509
    %529 = vmatmul.bf16.gmra.mxu0 %v438
    %v530 = vpop.f32.mrf.mxu0
    %v531 = vadd.f32 %v519, %v530
    %v532 = vpop.f32.mrf.mxu0
    %v533 = vadd.f32 %v519, %v532
    %534 = vmatmul.bf16.gmra.mxu0 %v439
    %v535 = vpop.f32.mrf.mxu0
    %v536 = vadd.f32 %v519, %v535
    %v537 = vpop.f32.mrf.mxu0
    %v538 = vadd.f32 %v519, %v537
    %539 = vmatmul.bf16.gmra.mxu0 %v440
    %v540 = vpop.f32.mrf.mxu0
    %v541 = vadd.f32 %v519, %v540
    %v542 = vpop.f32.mrf.mxu0
    %v543 = vadd.f32 %v519, %v542
    %544 = vmatmul.bf16.gmra.mxu0 %v441
    %v545 = vpop.f32.mrf.mxu0
    %v546 = vadd.f32 %v519, %v545
    %v547 = vpop.f32.mrf.mxu0
    %v548 = vadd.f32 %v519, %v547
    %549 = vdwg.mxu0
    %v550 = vld [vmem:[#allocation10] sm:$0xff]
    %v551 = vld [vmem:[#allocation10 + $0x8] sm:$0xff]
    %v552 = vld [vmem:[#allocation10 + $0x10] sm:$0xff]
    %v553 = vld [vmem:[#allocation10 + $0x18] sm:$0xff]
    %v554 = vld [vmem:[#allocation10 + $0x20] sm:$0xff]
    %v555 = vld [vmem:[#allocation10 + $0x28] sm:$0xff]
    %v556 = vld [vmem:[#allocation10 + $0x30] sm:$0xff]
    %v557 = vld [vmem:[#allocation10 + $0x38] sm:$0xff]
    %v558 = vld [vmem:[#allocation10 + $0x40] sm:$0xff]
    %v559 = vld [vmem:[#allocation10 + $0x48] sm:$0xff]
    %v560 = vld [vmem:[#allocation10 + $0x50] sm:$0xff]
    %v561 = vld [vmem:[#allocation10 + $0x58] sm:$0xff]
    %v562 = vld [vmem:[#allocation10 + $0x60] sm:$0xff]
    %v563 = vld [vmem:[#allocation10 + $0x68] sm:$0xff]
    %v564 = vld [vmem:[#allocation10 + $0x70] sm:$0xff]
    %v565 = vld [vmem:[#allocation10 + $0x78] sm:$0xff]
    %v566 = vpack.c.bf16 %v551, %v550
    %v567 = vpack.c.bf16 %v553, %v552
    %v568 = vpack.c.bf16 %v555, %v554
    %v569 = vpack.c.bf16 %v557, %v556
    %v570 = vpack.c.bf16 %v559, %v558
    %v571 = vpack.c.bf16 %v561, %v560
    %v572 = vpack.c.bf16 %v563, %v562
    %v573 = vpack.c.bf16 %v565, %v564
    %v574 = vld [vmem:[%s9] sm:$0x1]
    %v576 = vperm.slane %v574, 0
    %578 = vmatpush.bf16.msra.mxu0 %v573
    %579 = vmatpush.bf16.msra.mxu0 %v572
    %580 = vmatpush.bf16.msra.mxu0 %v571
    %581 = vmatpush.bf16.msra.mxu0 %v570
    %582 = vmatpush.bf16.msra.mxu0 %v569
    %583 = vmatpush.bf16.msra.mxu0 %v568
    %584 = vmatpush.bf16.msra.mxu0 %v567
    %585 = vmatpush.bf16.msra.mxu0 %v566
    %586 = vmatmul.bf16.gmra.mxu0 %v442
    %v587 = vpop.f32.mrf.mxu0
    %v588 = vadd.f32 %v576, %v587
    %v589 = vpop.f32.mrf.mxu0
    %v590 = vadd.f32 %v576, %v589
    %591 = vmatmul.bf16.gmra.mxu0 %v443
    %v592 = vpop.f32.mrf.mxu0
    %v593 = vadd.f32 %v576, %v592
    %v594 = vpop.f32.mrf.mxu0
    %v595 = vadd.f32 %v576, %v594
    %596 = vmatmul.bf16.gmra.mxu0 %v444
    %v597 = vpop.f32.mrf.mxu0
    %v598 = vadd.f32 %v576, %v597
    %v599 = vpop.f32.mrf.mxu0
    %v600 = vadd.f32 %v576, %v599
    %601 = vmatmul.bf16.gmra.mxu0 %v445
    %v602 = vpop.f32.mrf.mxu0
    %v603 = vadd.f32 %v576, %v602
    %v604 = vpop.f32.mrf.mxu0
    %v605 = vadd.f32 %v576, %v604
    %606 = vdwg.mxu0
    %v607 = vpack.c.bf16 %v484, %v484
    %v608 = vpack.c.bf16 %v486, %v486
    %v609 = vpack.c.bf16 %v489, %v489
    %v610 = vpack.c.bf16 %v491, %v491
    %v611 = vpack.c.bf16 %v531, %v531
    %v612 = vpack.c.bf16 %v533, %v533
    %v613 = vpack.c.bf16 %v536, %v536
    %v614 = vpack.c.bf16 %v538, %v538
    %v615 = vpack.c.bf16 %v541, %v541
    %v616 = vpack.c.bf16 %v543, %v543
    %v617 = vpack.c.bf16 %v546, %v546
    %v618 = vpack.c.bf16 %v548, %v548
    %v619 = vpack.c.bf16 %v588, %v588
    %v620 = vpack.c.bf16 %v590, %v590
    %v621 = vpack.c.bf16 %v593, %v593
    %v622 = vpack.c.bf16 %v595, %v595
    %v623 = vpack.c.bf16 %v598, %v598
    %v624 = vpack.c.bf16 %v600, %v600
    %v625 = vpack.c.bf16 %v603, %v603
    %v626 = vpack.c.bf16 %v605, %v605
    %v627 = vld [vmem:[%s0] sm:$0xff]
    %v628 = vld [vmem:[%s0 + $0x8] sm:$0xff]
    %v629 = vld [vmem:[%s0 + $0x10] sm:$0xff]
    %v630 = vld [vmem:[%s0 + $0x18] sm:$0xff]
    %v631 = vlaneseq
    %v632 = vand.u32 %v631, 127
    %633 = vset.pattern.permute.xlu0 0
    %634 = vperm.xlu0 %633, %v627
    %v635 = vpop.permute.xlu0 %634
    %636 = vset.pattern.permute.xlu0 0
    %637 = vperm.xlu0 %636, %v628
    %v638 = vpop.permute.xlu0 %637
    %639 = vset.pattern.permute.xlu0 0
    %640 = vperm.xlu0 %639, %v629
    %v641 = vpop.permute.xlu0 %640
    %642 = vset.pattern.permute.xlu0 0
    %643 = vperm.xlu0 %642, %v630
    %v644 = vpop.permute.xlu0 %643
    %vm645 = vcmp.eq.s32.totalorder %v632, %v635
    %vm646 = vcmp.eq.s32.totalorder %v632, %v638
    %vm647 = vcmp.eq.s32.totalorder %v632, %v641
    %vm648 = vcmp.eq.s32.totalorder %v632, %v644
    %649 = vset.pattern.permute.xlu0 1
    %650 = vperm.xlu0 %649, %v627
    %v651 = vpop.permute.xlu0 %650
    %652 = vset.pattern.permute.xlu0 1
    %653 = vperm.xlu0 %652, %v628
    %v654 = vpop.permute.xlu0 %653
    %655 = vset.pattern.permute.xlu0 1
    %656 = vperm.xlu0 %655, %v629
    %v657 = vpop.permute.xlu0 %656
    %658 = vset.pattern.permute.xlu0 1
    %659 = vperm.xlu0 %658, %v630
    %v660 = vpop.permute.xlu0 %659
    %vm661 = vcmp.eq.s32.totalorder %v632, %v651
    %vm662 = vcmp.eq.s32.totalorder %v632, %v654
    %vm663 = vcmp.eq.s32.totalorder %v632, %v657
    %vm664 = vcmp.eq.s32.totalorder %v632, %v660
    %vm665 = vmor %vm645, %vm661
    %vm666 = vmor %vm646, %vm662
    %vm667 = vmor %vm647, %vm663
    %vm668 = vmor %vm648, %vm664
    %669 = vset.pattern.permute.xlu0 2
    %670 = vperm.xlu0 %669, %v627
    %v671 = vpop.permute.xlu0 %670
    %672 = vset.pattern.permute.xlu0 2
    %673 = vperm.xlu0 %672, %v628
    %v674 = vpop.permute.xlu0 %673
    %675 = vset.pattern.permute.xlu0 2
    %676 = vperm.xlu0 %675, %v629
    %v677 = vpop.permute.xlu0 %676
    %678 = vset.pattern.permute.xlu0 2
    %679 = vperm.xlu0 %678, %v630
    %v680 = vpop.permute.xlu0 %679
    %vm681 = vcmp.eq.s32.totalorder %v632, %v671
    %vm682 = vcmp.eq.s32.totalorder %v632, %v674
    %vm683 = vcmp.eq.s32.totalorder %v632, %v677
    %vm684 = vcmp.eq.s32.totalorder %v632, %v680
    %vm685 = vmor %vm665, %vm681
    %vm686 = vmor %vm666, %vm682
    %vm687 = vmor %vm667, %vm683
    %vm688 = vmor %vm668, %vm684
    %689 = vset.pattern.permute.xlu0 3
    %690 = vperm.xlu0 %689, %v627
    %v691 = vpop.permute.xlu0 %690
    %692 = vset.pattern.permute.xlu0 3
    %693 = vperm.xlu0 %692, %v628
    %v694 = vpop.permute.xlu0 %693
    %695 = vset.pattern.permute.xlu0 3
    %696 = vperm.xlu0 %695, %v629
    %v697 = vpop.permute.xlu0 %696
    %698 = vset.pattern.permute.xlu0 3
    %699 = vperm.xlu0 %698, %v630
    %v700 = vpop.permute.xlu0 %699
    %vm701 = vcmp.eq.s32.totalorder %v632, %v691
    %vm702 = vcmp.eq.s32.totalorder %v632, %v694
    %vm703 = vcmp.eq.s32.totalorder %v632, %v697
    %vm704 = vcmp.eq.s32.totalorder %v632, %v700
    %vm705 = vmor %vm685, %vm701
    %vm706 = vmor %vm686, %vm702
    %vm707 = vmor %vm687, %vm703
    %vm708 = vmor %vm688, %vm704
    %v711 = vunpack.c.l.b16 %v611
    %v712 = vunpack.c.l.b16 %v612
    %v713 = vpack.c.b16 %v712, %v711
    %vm714 = vcmask 261120
    %v716 = vsel %vm714, %v607, 0
    %v719 = vsel %vm714, %v713, 0
    %721 = vmatpush.bf16.xpose.msra.mxu0 0
    %722 = vmatpush.bf16.xpose.msra.mxu0 0
    %723 = vmatpush.bf16.xpose.msra.mxu0 0
    %724 = vmatpush.bf16.xpose.msra.mxu0 0
    %725 = vmatpush.bf16.xpose.msra.mxu0 0
    %726 = vmatpush.bf16.xpose.msra.mxu0 0
    %727 = vmatpush.bf16.xpose.msra.mxu0 0
    %728 = vmatpush.bf16.xpose.msra.mxu0 %v719
    %729 = vmatmul.bf16.gmra.mxu0 %v716
    %v730 = vpop.f32.mrf.mxu0
    %v731 = vadd.f32 0.0, %v730
    %v732 = vpop.f32.mrf.mxu0
    %733 = vdwg.mxu0
    %v736 = vunpack.c.l.b16 %v613
    %v737 = vunpack.c.l.b16 %v614
    %v738 = vpack.c.b16 %v737, %v736
    %v740 = vsel %vm714, %v608, 0
    %v743 = vsel %vm714, %v738, 0
    %745 = vmatpush.bf16.xpose.msra.mxu0 0
    %746 = vmatpush.bf16.xpose.msra.mxu0 0
    %747 = vmatpush.bf16.xpose.msra.mxu0 0
    %748 = vmatpush.bf16.xpose.msra.mxu0 0
    %749 = vmatpush.bf16.xpose.msra.mxu0 0
    %750 = vmatpush.bf16.xpose.msra.mxu0 0
    %751 = vmatpush.bf16.xpose.msra.mxu0 0
    %752 = vmatpush.bf16.xpose.msra.mxu0 %v743
    %753 = vmatmul.bf16.gmra.mxu0 %v740
    %v754 = vpop.f32.mrf.mxu0
    %v755 = vadd.f32 0.0, %v754
    %v756 = vpop.f32.mrf.mxu0
    %757 = vdwg.mxu0
    %v760 = vunpack.c.l.b16 %v615
    %v761 = vunpack.c.l.b16 %v616
    %v762 = vpack.c.b16 %v761, %v760
    %v764 = vsel %vm714, %v609, 0
    %v767 = vsel %vm714, %v762, 0
    %769 = vmatpush.bf16.xpose.msra.mxu0 0
    %770 = vmatpush.bf16.xpose.msra.mxu0 0
    %771 = vmatpush.bf16.xpose.msra.mxu0 0
    %772 = vmatpush.bf16.xpose.msra.mxu0 0
    %773 = vmatpush.bf16.xpose.msra.mxu0 0
    %774 = vmatpush.bf16.xpose.msra.mxu0 0
    %775 = vmatpush.bf16.xpose.msra.mxu0 0
    %776 = vmatpush.bf16.xpose.msra.mxu0 %v767
    %777 = vmatmul.bf16.gmra.mxu0 %v764
    %v778 = vpop.f32.mrf.mxu0
    %v779 = vadd.f32 0.0, %v778
    %v780 = vpop.f32.mrf.mxu0
    %781 = vdwg.mxu0
    %v784 = vunpack.c.l.b16 %v617
    %v785 = vunpack.c.l.b16 %v618
    %v786 = vpack.c.b16 %v785, %v784
    %v788 = vsel %vm714, %v610, 0
    %v791 = vsel %vm714, %v786, 0
    %793 = vmatpush.bf16.xpose.msra.mxu0 0
    %794 = vmatpush.bf16.xpose.msra.mxu0 0
    %795 = vmatpush.bf16.xpose.msra.mxu0 0
    %796 = vmatpush.bf16.xpose.msra.mxu0 0
    %797 = vmatpush.bf16.xpose.msra.mxu0 0
    %798 = vmatpush.bf16.xpose.msra.mxu0 0
    %799 = vmatpush.bf16.xpose.msra.mxu0 0
    %800 = vmatpush.bf16.xpose.msra.mxu0 %v791
    %801 = vmatmul.bf16.gmra.mxu0 %v788
    %v802 = vpop.f32.mrf.mxu0
    %v803 = vadd.f32 0.0, %v802
    %v804 = vpop.f32.mrf.mxu0
    %805 = vdwg.mxu0
    %v806 = vsel %vm705, %v731, -1e+09
    %v807 = vsel %vm706, %v755, -1e+09
    %v808 = vsel %vm707, %v779, -1e+09
    %v809 = vsel %vm708, %v803, -1e+09
    %vm810 = vcmask 130048
    %v811 = vsel %vm810, %v806, -inf
    %812 = vmax.xlane.f32.xlu0 %v811
    %v813 = vpop.xlane.xlu0 %812
    %v814 = vsel %vm810, %v807, -inf
    %815 = vmax.xlane.f32.xlu0 %v814
    %v816 = vpop.xlane.xlu0 %815
    %v817 = vsel %vm810, %v808, -inf
    %818 = vmax.xlane.f32.xlu0 %v817
    %v819 = vpop.xlane.xlu0 %818
    %v820 = vsel %vm810, %v809, -inf
    %821 = vmax.xlane.f32.xlu0 %v820
    %v822 = vpop.xlane.xlu0 %821
    %v823 = vsub.f32 %v806, %v813
    %v824 = vsub.f32 %v807, %v816
    %v825 = vsub.f32 %v808, %v819
    %v826 = vsub.f32 %v809, %v822
    %v827 = vmul.f32 %v823, 1.442695
    %v828 = vpow.pop %v827
    %v829 = vmul.f32 %v824, 1.442695
    %v830 = vpow.pop %v829
    %v831 = vmul.f32 %v825, 1.442695
    %v832 = vpow.pop %v831
    %v833 = vmul.f32 %v826, 1.442695
    %v834 = vpow.pop %v833
    %v835 = vsel %vm810, %v828, 0.0
    %836 = vadd.xlane.f32.xlu0 %v835
    %v837 = vpop.xlane.xlu0 %836
    %v838 = vsel %vm810, %v830, 0.0
    %839 = vadd.xlane.f32.xlu0 %v838
    %v840 = vpop.xlane.xlu0 %839
    %v841 = vsel %vm810, %v832, 0.0
    %842 = vadd.xlane.f32.xlu0 %v841
    %v843 = vpop.xlane.xlu0 %842
    %v844 = vsel %vm810, %v834, 0.0
    %845 = vadd.xlane.f32.xlu0 %v844
    %v846 = vpop.xlane.xlu0 %845
    %v847 = vrcp.pop %v837
    %v848 = vrcp.pop %v840
    %v849 = vrcp.pop %v843
    %v850 = vrcp.pop %v846
    %v851 = vmul.f32 %v837, %v847
    %v852 = vmul.f32 %v840, %v848
    %v853 = vmul.f32 %v843, %v849
    %v854 = vmul.f32 %v846, %v850
    %v855 = vsub.f32 2.0, %v851
    %v856 = vsub.f32 2.0, %v852
    %v857 = vsub.f32 2.0, %v853
    %v858 = vsub.f32 2.0, %v854
    %v859 = vmul.f32 %v847, %v855
    %v860 = vmul.f32 %v848, %v856
    %v861 = vmul.f32 %v849, %v857
    %v862 = vmul.f32 %v850, %v858
    %v863 = vmul.f32 %v828, %v859
    %v864 = vmul.f32 %v830, %v860
    %v865 = vmul.f32 %v832, %v861
    %v866 = vmul.f32 %v834, %v862
    %v867 = vpack.c.bf16 %v863, %v863
    %v868 = vpack.c.bf16 %v864, %v864
    %v869 = vpack.c.bf16 %v865, %v865
    %v870 = vpack.c.bf16 %v866, %v866
    %v873 = vunpack.c.l.b16 %v619
    %v874 = vunpack.c.l.b16 %v620
    %v875 = vpack.c.b16 %v874, %v873
    %v878 = vsel %vm810, %v867, 0
    %880 = vmatpush.bf16.msra.mxu0 0
    %881 = vmatpush.bf16.msra.mxu0 0
    %882 = vmatpush.bf16.msra.mxu0 0
    %883 = vmatpush.bf16.msra.mxu0 0
    %884 = vmatpush.bf16.msra.mxu0 0
    %885 = vmatpush.bf16.msra.mxu0 0
    %886 = vmatpush.bf16.msra.mxu0 0
    %887 = vmatpush.bf16.msra.mxu0 %v875
    %888 = vmatmul.bf16.gmra.mxu0 %v878
    %v889 = vpop.f32.mrf.mxu0
    %v890 = vadd.f32 0.0, %v889
    %v891 = vpop.f32.mrf.mxu0
    %892 = vdwg.mxu0
    %v895 = vunpack.c.l.b16 %v621
    %v896 = vunpack.c.l.b16 %v622
    %v897 = vpack.c.b16 %v896, %v895
    %v900 = vsel %vm810, %v868, 0
    %902 = vmatpush.bf16.msra.mxu0 0
    %903 = vmatpush.bf16.msra.mxu0 0
    %904 = vmatpush.bf16.msra.mxu0 0
    %905 = vmatpush.bf16.msra.mxu0 0
    %906 = vmatpush.bf16.msra.mxu0 0
    %907 = vmatpush.bf16.msra.mxu0 0
    %908 = vmatpush.bf16.msra.mxu0 0
    %909 = vmatpush.bf16.msra.mxu0 %v897
    %910 = vmatmul.bf16.gmra.mxu0 %v900
    %v911 = vpop.f32.mrf.mxu0
    %v912 = vadd.f32 0.0, %v911
    %v913 = vpop.f32.mrf.mxu0
    %914 = vdwg.mxu0
    %v917 = vunpack.c.l.b16 %v623
    %v918 = vunpack.c.l.b16 %v624
    %v919 = vpack.c.b16 %v918, %v917
    %v922 = vsel %vm810, %v869, 0
    %924 = vmatpush.bf16.msra.mxu0 0
    %925 = vmatpush.bf16.msra.mxu0 0
    %926 = vmatpush.bf16.msra.mxu0 0
    %927 = vmatpush.bf16.msra.mxu0 0
    %928 = vmatpush.bf16.msra.mxu0 0
    %929 = vmatpush.bf16.msra.mxu0 0
    %930 = vmatpush.bf16.msra.mxu0 0
    %931 = vmatpush.bf16.msra.mxu0 %v919
    %932 = vmatmul.bf16.gmra.mxu0 %v922
    %v933 = vpop.f32.mrf.mxu0
    %v934 = vadd.f32 0.0, %v933
    %v935 = vpop.f32.mrf.mxu0
    %936 = vdwg.mxu0
    %v939 = vunpack.c.l.b16 %v625
    %v940 = vunpack.c.l.b16 %v626
    %v941 = vpack.c.b16 %v940, %v939
    %v944 = vsel %vm810, %v870, 0
    %946 = vmatpush.bf16.msra.mxu0 0
    %947 = vmatpush.bf16.msra.mxu0 0
    %948 = vmatpush.bf16.msra.mxu0 0
    %949 = vmatpush.bf16.msra.mxu0 0
    %950 = vmatpush.bf16.msra.mxu0 0
    %951 = vmatpush.bf16.msra.mxu0 0
    %952 = vmatpush.bf16.msra.mxu0 0
    %953 = vmatpush.bf16.msra.mxu0 %v941
    %954 = vmatmul.bf16.gmra.mxu0 %v944
    %v955 = vpop.f32.mrf.mxu0
    %v956 = vadd.f32 0.0, %v955
    %v957 = vpop.f32.mrf.mxu0
    %958 = vdwg.mxu0
    %v960 = vunpack.c.l.b16 %v607
    %v961 = vpack.c.b16 %v960, %v960
    %962 = vrot.lane.b32.xlu0 %v961, 96
    %v963 = vpop.permute.xlu0 %962
    %964 = vrot.lane.b32.xlu0 %v713, 96
    %v965 = vpop.permute.xlu0 %964
    %v967 = vsel %vm714, %v963, 0
    %v970 = vsel %vm714, %v965, 0
    %972 = vmatpush.bf16.xpose.msra.mxu0 0
    %973 = vmatpush.bf16.xpose.msra.mxu0 0
    %974 = vmatpush.bf16.xpose.msra.mxu0 0
    %975 = vmatpush.bf16.xpose.msra.mxu0 0
    %976 = vmatpush.bf16.xpose.msra.mxu0 0
    %977 = vmatpush.bf16.xpose.msra.mxu0 0
    %978 = vmatpush.bf16.xpose.msra.mxu0 0
    %979 = vmatpush.bf16.xpose.msra.mxu0 %v970
    %980 = vmatmul.bf16.gmra.mxu0 %v967
    %v981 = vpop.f32.mrf.mxu0
    %v982 = vadd.f32 0.0, %v981
    %v983 = vpop.f32.mrf.mxu0
    %984 = vdwg.mxu0
    %v986 = vunpack.c.l.b16 %v608
    %v987 = vpack.c.b16 %v986, %v986
    %988 = vrot.lane.b32.xlu0 %v987, 96
    %v989 = vpop.permute.xlu0 %988
    %990 = vrot.lane.b32.xlu0 %v738, 96
    %v991 = vpop.permute.xlu0 %990
    %v993 = vsel %vm714, %v989, 0
    %v996 = vsel %vm714, %v991, 0
    %998 = vmatpush.bf16.xpose.msra.mxu0 0
    %999 = vmatpush.bf16.xpose.msra.mxu0 0
    %1000 = vmatpush.bf16.xpose.msra.mxu0 0
    %1001 = vmatpush.bf16.xpose.msra.mxu0 0
    %1002 = vmatpush.bf16.xpose.msra.mxu0 0
    %1003 = vmatpush.bf16.xpose.msra.mxu0 0
    %1004 = vmatpush.bf16.xpose.msra.mxu0 0
    %1005 = vmatpush.bf16.xpose.msra.mxu0 %v996
    %1006 = vmatmul.bf16.gmra.mxu0 %v993
    %v1007 = vpop.f32.mrf.mxu0
    %v1008 = vadd.f32 0.0, %v1007
    %v1009 = vpop.f32.mrf.mxu0
    %1010 = vdwg.mxu0
    %v1012 = vunpack.c.l.b16 %v609
    %v1013 = vpack.c.b16 %v1012, %v1012
    %1014 = vrot.lane.b32.xlu0 %v1013, 96
    %v1015 = vpop.permute.xlu0 %1014
    %1016 = vrot.lane.b32.xlu0 %v762, 96
    %v1017 = vpop.permute.xlu0 %1016
    %v1019 = vsel %vm714, %v1015, 0
    %v1022 = vsel %vm714, %v1017, 0
    %1024 = vmatpush.bf16.xpose.msra.mxu0 0
    %1025 = vmatpush.bf16.xpose.msra.mxu0 0
    %1026 = vmatpush.bf16.xpose.msra.mxu0 0
    %1027 = vmatpush.bf16.xpose.msra.mxu0 0
    %1028 = vmatpush.bf16.xpose.msra.mxu0 0
    %1029 = vmatpush.bf16.xpose.msra.mxu0 0
    %1030 = vmatpush.bf16.xpose.msra.mxu0 0
    %1031 = vmatpush.bf16.xpose.msra.mxu0 %v1022
    %1032 = vmatmul.bf16.gmra.mxu0 %v1019
    %v1033 = vpop.f32.mrf.mxu0
    %v1034 = vadd.f32 0.0, %v1033
    %v1035 = vpop.f32.mrf.mxu0
    %1036 = vdwg.mxu0
    %v1038 = vunpack.c.l.b16 %v610
    %v1039 = vpack.c.b16 %v1038, %v1038
    %1040 = vrot.lane.b32.xlu0 %v1039, 96
    %v1041 = vpop.permute.xlu0 %1040
    %1042 = vrot.lane.b32.xlu0 %v786, 96
    %v1043 = vpop.permute.xlu0 %1042
    %v1045 = vsel %vm714, %v1041, 0
    %v1048 = vsel %vm714, %v1043, 0
    %1050 = vmatpush.bf16.xpose.msra.mxu0 0
    %1051 = vmatpush.bf16.xpose.msra.mxu0 0
    %1052 = vmatpush.bf16.xpose.msra.mxu0 0
    %1053 = vmatpush.bf16.xpose.msra.mxu0 0
    %1054 = vmatpush.bf16.xpose.msra.mxu0 0
    %1055 = vmatpush.bf16.xpose.msra.mxu0 0
    %1056 = vmatpush.bf16.xpose.msra.mxu0 0
    %1057 = vmatpush.bf16.xpose.msra.mxu0 %v1048
    %1058 = vmatmul.bf16.gmra.mxu0 %v1045
    %v1059 = vpop.f32.mrf.mxu0
    %v1060 = vadd.f32 0.0, %v1059
    %v1061 = vpop.f32.mrf.mxu0
    %1062 = vdwg.mxu0
    %v1063 = vsel %vm705, %v982, -1e+09
    %v1064 = vsel %vm706, %v1008, -1e+09
    %v1065 = vsel %vm707, %v1034, -1e+09
    %v1066 = vsel %vm708, %v1060, -1e+09
    %v1067 = vsel %vm810, %v1063, -inf
    %1068 = vmax.xlane.f32.xlu0 %v1067
    %v1069 = vpop.xlane.xlu0 %1068
    %v1070 = vsel %vm810, %v1064, -inf
    %1071 = vmax.xlane.f32.xlu0 %v1070
    %v1072 = vpop.xlane.xlu0 %1071
    %v1073 = vsel %vm810, %v1065, -inf
    %1074 = vmax.xlane.f32.xlu0 %v1073
    %v1075 = vpop.xlane.xlu0 %1074
    %v1076 = vsel %vm810, %v1066, -inf
    %1077 = vmax.xlane.f32.xlu0 %v1076
    %v1078 = vpop.xlane.xlu0 %1077
    %v1079 = vsub.f32 %v1063, %v1069
    %v1080 = vsub.f32 %v1064, %v1072
    %v1081 = vsub.f32 %v1065, %v1075
    %v1082 = vsub.f32 %v1066, %v1078
    %v1083 = vmul.f32 %v1079, 1.442695
    %v1084 = vpow.pop %v1083
    %v1085 = vmul.f32 %v1080, 1.442695
    %v1086 = vpow.pop %v1085
    %v1087 = vmul.f32 %v1081, 1.442695
    %v1088 = vpow.pop %v1087
    %v1089 = vmul.f32 %v1082, 1.442695
    %v1090 = vpow.pop %v1089
    %v1091 = vsel %vm810, %v1084, 0.0
    %1092 = vadd.xlane.f32.xlu0 %v1091
    %v1093 = vpop.xlane.xlu0 %1092
    %v1094 = vsel %vm810, %v1086, 0.0
    %1095 = vadd.xlane.f32.xlu0 %v1094
    %v1096 = vpop.xlane.xlu0 %1095
    %v1097 = vsel %vm810, %v1088, 0.0
    %1098 = vadd.xlane.f32.xlu0 %v1097
    %v1099 = vpop.xlane.xlu0 %1098
    %v1100 = vsel %vm810, %v1090, 0.0
    %1101 = vadd.xlane.f32.xlu0 %v1100
    %v1102 = vpop.xlane.xlu0 %1101
    %v1103 = vrcp.pop %v1093
    %v1104 = vrcp.pop %v1096
    %v1105 = vrcp.pop %v1099
    %v1106 = vrcp.pop %v1102
    %v1107 = vmul.f32 %v1093, %v1103
    %v1108 = vmul.f32 %v1096, %v1104
    %v1109 = vmul.f32 %v1099, %v1105
    %v1110 = vmul.f32 %v1102, %v1106
    %v1111 = vsub.f32 2.0, %v1107
    %v1112 = vsub.f32 2.0, %v1108
    %v1113 = vsub.f32 2.0, %v1109
    %v1114 = vsub.f32 2.0, %v1110
    %v1115 = vmul.f32 %v1103, %v1111
    %v1116 = vmul.f32 %v1104, %v1112
    %v1117 = vmul.f32 %v1105, %v1113
    %v1118 = vmul.f32 %v1106, %v1114
    %v1119 = vmul.f32 %v1084, %v1115
    %v1120 = vmul.f32 %v1086, %v1116
    %v1121 = vmul.f32 %v1088, %v1117
    %v1122 = vmul.f32 %v1090, %v1118
    %v1123 = vpack.c.bf16 %v1119, %v1119
    %v1124 = vpack.c.bf16 %v1120, %v1120
    %v1125 = vpack.c.bf16 %v1121, %v1121
    %v1126 = vpack.c.bf16 %v1122, %v1122
    %1127 = vrot.lane.b32.xlu0 %v875, 96
    %v1128 = vpop.permute.xlu0 %1127
    %v1131 = vsel %vm810, %v1123, 0
    %1133 = vmatpush.bf16.msra.mxu0 0
    %1134 = vmatpush.bf16.msra.mxu0 0
    %1135 = vmatpush.bf16.msra.mxu0 0
    %1136 = vmatpush.bf16.msra.mxu0 0
    %1137 = vmatpush.bf16.msra.mxu0 0
    %1138 = vmatpush.bf16.msra.mxu0 0
    %1139 = vmatpush.bf16.msra.mxu0 0
    %1140 = vmatpush.bf16.msra.mxu0 %v1128
    %1141 = vmatmul.bf16.gmra.mxu0 %v1131
    %v1142 = vpop.f32.mrf.mxu0
    %v1143 = vadd.f32 0.0, %v1142
    %v1144 = vpop.f32.mrf.mxu0
    %1145 = vdwg.mxu0
    %1146 = vrot.lane.b32.xlu0 %v897, 96
    %v1147 = vpop.permute.xlu0 %1146
    %v1150 = vsel %vm810, %v1124, 0
    %1152 = vmatpush.bf16.msra.mxu0 0
    %1153 = vmatpush.bf16.msra.mxu0 0
    %1154 = vmatpush.bf16.msra.mxu0 0
    %1155 = vmatpush.bf16.msra.mxu0 0
    %1156 = vmatpush.bf16.msra.mxu0 0
    %1157 = vmatpush.bf16.msra.mxu0 0
    %1158 = vmatpush.bf16.msra.mxu0 0
    %1159 = vmatpush.bf16.msra.mxu0 %v1147
    %1160 = vmatmul.bf16.gmra.mxu0 %v1150
    %v1161 = vpop.f32.mrf.mxu0
    %v1162 = vadd.f32 0.0, %v1161
    %v1163 = vpop.f32.mrf.mxu0
    %1164 = vdwg.mxu0
    %1165 = vrot.lane.b32.xlu0 %v919, 96
    %v1166 = vpop.permute.xlu0 %1165
    %v1169 = vsel %vm810, %v1125, 0
    %1171 = vmatpush.bf16.msra.mxu0 0
    %1172 = vmatpush.bf16.msra.mxu0 0
    %1173 = vmatpush.bf16.msra.mxu0 0
    %1174 = vmatpush.bf16.msra.mxu0 0
    %1175 = vmatpush.bf16.msra.mxu0 0
    %1176 = vmatpush.bf16.msra.mxu0 0
    %1177 = vmatpush.bf16.msra.mxu0 0
    %1178 = vmatpush.bf16.msra.mxu0 %v1166
    %1179 = vmatmul.bf16.gmra.mxu0 %v1169
    %v1180 = vpop.f32.mrf.mxu0
    %v1181 = vadd.f32 0.0, %v1180
    %v1182 = vpop.f32.mrf.mxu0
    %1183 = vdwg.mxu0
    %1184 = vrot.lane.b32.xlu0 %v941, 96
    %v1185 = vpop.permute.xlu0 %1184
    %v1188 = vsel %vm810, %v1126, 0
    %1190 = vmatpush.bf16.msra.mxu0 0
    %1191 = vmatpush.bf16.msra.mxu0 0
    %1192 = vmatpush.bf16.msra.mxu0 0
    %1193 = vmatpush.bf16.msra.mxu0 0
    %1194 = vmatpush.bf16.msra.mxu0 0
    %1195 = vmatpush.bf16.msra.mxu0 0
    %1196 = vmatpush.bf16.msra.mxu0 0
    %1197 = vmatpush.bf16.msra.mxu0 %v1185
    %1198 = vmatmul.bf16.gmra.mxu0 %v1188
    %v1199 = vpop.f32.mrf.mxu0
    %v1200 = vadd.f32 0.0, %v1199
    %v1201 = vpop.f32.mrf.mxu0
    %1202 = vdwg.mxu0
    %1203 = vrot.lane.b32.xlu0 %v961, 64
    %v1204 = vpop.permute.xlu0 %1203
    %1205 = vrot.lane.b32.xlu0 %v713, 64
    %v1206 = vpop.permute.xlu0 %1205
    %v1208 = vsel %vm714, %v1204, 0
    %v1211 = vsel %vm714, %v1206, 0
    %1213 = vmatpush.bf16.xpose.msra.mxu0 0
    %1214 = vmatpush.bf16.xpose.msra.mxu0 0
    %1215 = vmatpush.bf16.xpose.msra.mxu0 0
    %1216 = vmatpush.bf16.xpose.msra.mxu0 0
    %1217 = vmatpush.bf16.xpose.msra.mxu0 0
    %1218 = vmatpush.bf16.xpose.msra.mxu0 0
    %1219 = vmatpush.bf16.xpose.msra.mxu0 0
    %1220 = vmatpush.bf16.xpose.msra.mxu0 %v1211
    %1221 = vmatmul.bf16.gmra.mxu0 %v1208
    %v1222 = vpop.f32.mrf.mxu0
    %v1223 = vadd.f32 0.0, %v1222
    %v1224 = vpop.f32.mrf.mxu0
    %1225 = vdwg.mxu0
    %1226 = vrot.lane.b32.xlu0 %v987, 64
    %v1227 = vpop.permute.xlu0 %1226
    %1228 = vrot.lane.b32.xlu0 %v738, 64
    %v1229 = vpop.permute.xlu0 %1228
    %v1231 = vsel %vm714, %v1227, 0
    %v1234 = vsel %vm714, %v1229, 0
    %1236 = vmatpush.bf16.xpose.msra.mxu0 0
    %1237 = vmatpush.bf16.xpose.msra.mxu0 0
    %1238 = vmatpush.bf16.xpose.msra.mxu0 0
    %1239 = vmatpush.bf16.xpose.msra.mxu0 0
    %1240 = vmatpush.bf16.xpose.msra.mxu0 0
    %1241 = vmatpush.bf16.xpose.msra.mxu0 0
    %1242 = vmatpush.bf16.xpose.msra.mxu0 0
    %1243 = vmatpush.bf16.xpose.msra.mxu0 %v1234
    %1244 = vmatmul.bf16.gmra.mxu0 %v1231
    %v1245 = vpop.f32.mrf.mxu0
    %v1246 = vadd.f32 0.0, %v1245
    %v1247 = vpop.f32.mrf.mxu0
    %1248 = vdwg.mxu0
    %1249 = vrot.lane.b32.xlu0 %v1013, 64
    %v1250 = vpop.permute.xlu0 %1249
    %1251 = vrot.lane.b32.xlu0 %v762, 64
    %v1252 = vpop.permute.xlu0 %1251
    %v1254 = vsel %vm714, %v1250, 0
    %v1257 = vsel %vm714, %v1252, 0
    %1259 = vmatpush.bf16.xpose.msra.mxu0 0
    %1260 = vmatpush.bf16.xpose.msra.mxu0 0
    %1261 = vmatpush.bf16.xpose.msra.mxu0 0
    %1262 = vmatpush.bf16.xpose.msra.mxu0 0
    %1263 = vmatpush.bf16.xpose.msra.mxu0 0
    %1264 = vmatpush.bf16.xpose.msra.mxu0 0
    %1265 = vmatpush.bf16.xpose.msra.mxu0 0
    %1266 = vmatpush.bf16.xpose.msra.mxu0 %v1257
    %1267 = vmatmul.bf16.gmra.mxu0 %v1254
    %v1268 = vpop.f32.mrf.mxu0
    %v1269 = vadd.f32 0.0, %v1268
    %v1270 = vpop.f32.mrf.mxu0
    %1271 = vdwg.mxu0
    %1272 = vrot.lane.b32.xlu0 %v1039, 64
    %v1273 = vpop.permute.xlu0 %1272
    %1274 = vrot.lane.b32.xlu0 %v786, 64
    %v1275 = vpop.permute.xlu0 %1274
    %v1277 = vsel %vm714, %v1273, 0
    %v1280 = vsel %vm714, %v1275, 0
    %1282 = vmatpush.bf16.xpose.msra.mxu0 0
    %1283 = vmatpush.bf16.xpose.msra.mxu0 0
    %1284 = vmatpush.bf16.xpose.msra.mxu0 0
    %1285 = vmatpush.bf16.xpose.msra.mxu0 0
    %1286 = vmatpush.bf16.xpose.msra.mxu0 0
    %1287 = vmatpush.bf16.xpose.msra.mxu0 0
    %1288 = vmatpush.bf16.xpose.msra.mxu0 0
    %1289 = vmatpush.bf16.xpose.msra.mxu0 %v1280
    %1290 = vmatmul.bf16.gmra.mxu0 %v1277
    %v1291 = vpop.f32.mrf.mxu0
    %v1292 = vadd.f32 0.0, %v1291
    %v1293 = vpop.f32.mrf.mxu0
    %1294 = vdwg.mxu0
    %v1295 = vsel %vm705, %v1223, -1e+09
    %v1296 = vsel %vm706, %v1246, -1e+09
    %v1297 = vsel %vm707, %v1269, -1e+09
    %v1298 = vsel %vm708, %v1292, -1e+09
    %v1299 = vsel %vm810, %v1295, -inf
    %1300 = vmax.xlane.f32.xlu0 %v1299
    %v1301 = vpop.xlane.xlu0 %1300
    %v1302 = vsel %vm810, %v1296, -inf
    %1303 = vmax.xlane.f32.xlu0 %v1302
    %v1304 = vpop.xlane.xlu0 %1303
    %v1305 = vsel %vm810, %v1297, -inf
    %1306 = vmax.xlane.f32.xlu0 %v1305
    %v1307 = vpop.xlane.xlu0 %1306
    %v1308 = vsel %vm810, %v1298, -inf
    %1309 = vmax.xlane.f32.xlu0 %v1308
    %v1310 = vpop.xlane.xlu0 %1309
    %v1311 = vsub.f32 %v1295, %v1301
    %v1312 = vsub.f32 %v1296, %v1304
    %v1313 = vsub.f32 %v1297, %v1307
    %v1314 = vsub.f32 %v1298, %v1310
    %v1315 = vmul.f32 %v1311, 1.442695
    %v1316 = vpow.pop %v1315
    %v1317 = vmul.f32 %v1312, 1.442695
    %v1318 = vpow.pop %v1317
    %v1319 = vmul.f32 %v1313, 1.442695
    %v1320 = vpow.pop %v1319
    %v1321 = vmul.f32 %v1314, 1.442695
    %v1322 = vpow.pop %v1321
    %v1323 = vsel %vm810, %v1316, 0.0
    %1324 = vadd.xlane.f32.xlu0 %v1323
    %v1325 = vpop.xlane.xlu0 %1324
    %v1326 = vsel %vm810, %v1318, 0.0
    %1327 = vadd.xlane.f32.xlu0 %v1326
    %v1328 = vpop.xlane.xlu0 %1327
    %v1329 = vsel %vm810, %v1320, 0.0
    %1330 = vadd.xlane.f32.xlu0 %v1329
    %v1331 = vpop.xlane.xlu0 %1330
    %v1332 = vsel %vm810, %v1322, 0.0
    %1333 = vadd.xlane.f32.xlu0 %v1332
    %v1334 = vpop.xlane.xlu0 %1333
    %v1335 = vrcp.pop %v1325
    %v1336 = vrcp.pop %v1328
    %v1337 = vrcp.pop %v1331
    %v1338 = vrcp.pop %v1334
    %v1339 = vmul.f32 %v1325, %v1335
    %v1340 = vmul.f32 %v1328, %v1336
    %v1341 = vmul.f32 %v1331, %v1337
    %v1342 = vmul.f32 %v1334, %v1338
    %v1343 = vsub.f32 2.0, %v1339
    %v1344 = vsub.f32 2.0, %v1340
    %v1345 = vsub.f32 2.0, %v1341
    %v1346 = vsub.f32 2.0, %v1342
    %v1347 = vmul.f32 %v1335, %v1343
    %v1348 = vmul.f32 %v1336, %v1344
    %v1349 = vmul.f32 %v1337, %v1345
    %v1350 = vmul.f32 %v1338, %v1346
    %v1351 = vmul.f32 %v1316, %v1347
    %v1352 = vmul.f32 %v1318, %v1348
    %v1353 = vmul.f32 %v1320, %v1349
    %v1354 = vmul.f32 %v1322, %v1350
    %v1355 = vpack.c.bf16 %v1351, %v1351
    %v1356 = vpack.c.bf16 %v1352, %v1352
    %v1357 = vpack.c.bf16 %v1353, %v1353
    %v1358 = vpack.c.bf16 %v1354, %v1354
    %1359 = vrot.lane.b32.xlu0 %v875, 64
    %v1360 = vpop.permute.xlu0 %1359
    %v1363 = vsel %vm810, %v1355, 0
    %1365 = vmatpush.bf16.msra.mxu0 0
    %1366 = vmatpush.bf16.msra.mxu0 0
    %1367 = vmatpush.bf16.msra.mxu0 0
    %1368 = vmatpush.bf16.msra.mxu0 0
    %1369 = vmatpush.bf16.msra.mxu0 0
    %1370 = vmatpush.bf16.msra.mxu0 0
    %1371 = vmatpush.bf16.msra.mxu0 0
    %1372 = vmatpush.bf16.msra.mxu0 %v1360
    %1373 = vmatmul.bf16.gmra.mxu0 %v1363
    %v1374 = vpop.f32.mrf.mxu0
    %v1375 = vadd.f32 0.0, %v1374
    %v1376 = vpop.f32.mrf.mxu0
    %1377 = vdwg.mxu0
    %1378 = vrot.lane.b32.xlu0 %v897, 64
    %v1379 = vpop.permute.xlu0 %1378
    %v1382 = vsel %vm810, %v1356, 0
    %1384 = vmatpush.bf16.msra.mxu0 0
    %1385 = vmatpush.bf16.msra.mxu0 0
    %1386 = vmatpush.bf16.msra.mxu0 0
    %1387 = vmatpush.bf16.msra.mxu0 0
    %1388 = vmatpush.bf16.msra.mxu0 0
    %1389 = vmatpush.bf16.msra.mxu0 0
    %1390 = vmatpush.bf16.msra.mxu0 0
    %1391 = vmatpush.bf16.msra.mxu0 %v1379
    %1392 = vmatmul.bf16.gmra.mxu0 %v1382
    %v1393 = vpop.f32.mrf.mxu0
    %v1394 = vadd.f32 0.0, %v1393
    %v1395 = vpop.f32.mrf.mxu0
    %1396 = vdwg.mxu0
    %1397 = vrot.lane.b32.xlu0 %v919, 64
    %v1398 = vpop.permute.xlu0 %1397
    %v1401 = vsel %vm810, %v1357, 0
    %1403 = vmatpush.bf16.msra.mxu0 0
    %1404 = vmatpush.bf16.msra.mxu0 0
    %1405 = vmatpush.bf16.msra.mxu0 0
    %1406 = vmatpush.bf16.msra.mxu0 0
    %1407 = vmatpush.bf16.msra.mxu0 0
    %1408 = vmatpush.bf16.msra.mxu0 0
    %1409 = vmatpush.bf16.msra.mxu0 0
    %1410 = vmatpush.bf16.msra.mxu0 %v1398
    %1411 = vmatmul.bf16.gmra.mxu0 %v1401
    %v1412 = vpop.f32.mrf.mxu0
    %v1413 = vadd.f32 0.0, %v1412
    %v1414 = vpop.f32.mrf.mxu0
    %1415 = vdwg.mxu0
    %1416 = vrot.lane.b32.xlu0 %v941, 64
    %v1417 = vpop.permute.xlu0 %1416
    %v1420 = vsel %vm810, %v1358, 0
    %1422 = vmatpush.bf16.msra.mxu0 0
    %1423 = vmatpush.bf16.msra.mxu0 0
    %1424 = vmatpush.bf16.msra.mxu0 0
    %1425 = vmatpush.bf16.msra.mxu0 0
    %1426 = vmatpush.bf16.msra.mxu0 0
    %1427 = vmatpush.bf16.msra.mxu0 0
    %1428 = vmatpush.bf16.msra.mxu0 0
    %1429 = vmatpush.bf16.msra.mxu0 %v1417
    %1430 = vmatmul.bf16.gmra.mxu0 %v1420
    %v1431 = vpop.f32.mrf.mxu0
    %v1432 = vadd.f32 0.0, %v1431
    %v1433 = vpop.f32.mrf.mxu0
    %1434 = vdwg.mxu0
    %1435 = vrot.lane.b32.xlu0 %v961, 32
    %v1436 = vpop.permute.xlu0 %1435
    %1437 = vrot.lane.b32.xlu0 %v713, 32
    %v1438 = vpop.permute.xlu0 %1437
    %v1440 = vsel %vm714, %v1436, 0
    %v1443 = vsel %vm714, %v1438, 0
    %1445 = vmatpush.bf16.xpose.msra.mxu0 0
    %1446 = vmatpush.bf16.xpose.msra.mxu0 0
    %1447 = vmatpush.bf16.xpose.msra.mxu0 0
    %1448 = vmatpush.bf16.xpose.msra.mxu0 0
    %1449 = vmatpush.bf16.xpose.msra.mxu0 0
    %1450 = vmatpush.bf16.xpose.msra.mxu0 0
    %1451 = vmatpush.bf16.xpose.msra.mxu0 0
    %1452 = vmatpush.bf16.xpose.msra.mxu0 %v1443
    %1453 = vmatmul.bf16.gmra.mxu0 %v1440
    %v1454 = vpop.f32.mrf.mxu0
    %v1455 = vadd.f32 0.0, %v1454
    %v1456 = vpop.f32.mrf.mxu0
    %1457 = vdwg.mxu0
    %1458 = vrot.lane.b32.xlu0 %v987, 32
    %v1459 = vpop.permute.xlu0 %1458
    %1460 = vrot.lane.b32.xlu0 %v738, 32
    %v1461 = vpop.permute.xlu0 %1460
    %v1463 = vsel %vm714, %v1459, 0
    %v1466 = vsel %vm714, %v1461, 0
    %1468 = vmatpush.bf16.xpose.msra.mxu0 0
    %1469 = vmatpush.bf16.xpose.msra.mxu0 0
    %1470 = vmatpush.bf16.xpose.msra.mxu0 0
    %1471 = vmatpush.bf16.xpose.msra.mxu0 0
    %1472 = vmatpush.bf16.xpose.msra.mxu0 0
    %1473 = vmatpush.bf16.xpose.msra.mxu0 0
    %1474 = vmatpush.bf16.xpose.msra.mxu0 0
    %1475 = vmatpush.bf16.xpose.msra.mxu0 %v1466
    %1476 = vmatmul.bf16.gmra.mxu0 %v1463
    %v1477 = vpop.f32.mrf.mxu0
    %v1478 = vadd.f32 0.0, %v1477
    %v1479 = vpop.f32.mrf.mxu0
    %1480 = vdwg.mxu0
    %1481 = vrot.lane.b32.xlu0 %v1013, 32
    %v1482 = vpop.permute.xlu0 %1481
    %1483 = vrot.lane.b32.xlu0 %v762, 32
    %v1484 = vpop.permute.xlu0 %1483
    %v1486 = vsel %vm714, %v1482, 0
    %v1489 = vsel %vm714, %v1484, 0
    %1491 = vmatpush.bf16.xpose.msra.mxu0 0
    %1492 = vmatpush.bf16.xpose.msra.mxu0 0
    %1493 = vmatpush.bf16.xpose.msra.mxu0 0
    %1494 = vmatpush.bf16.xpose.msra.mxu0 0
    %1495 = vmatpush.bf16.xpose.msra.mxu0 0
    %1496 = vmatpush.bf16.xpose.msra.mxu0 0
    %1497 = vmatpush.bf16.xpose.msra.mxu0 0
    %1498 = vmatpush.bf16.xpose.msra.mxu0 %v1489
    %1499 = vmatmul.bf16.gmra.mxu0 %v1486
    %v1500 = vpop.f32.mrf.mxu0
    %v1501 = vadd.f32 0.0, %v1500
    %v1502 = vpop.f32.mrf.mxu0
    %1503 = vdwg.mxu0
    %1504 = vrot.lane.b32.xlu0 %v1039, 32
    %v1505 = vpop.permute.xlu0 %1504
    %1506 = vrot.lane.b32.xlu0 %v786, 32
    %v1507 = vpop.permute.xlu0 %1506
    %v1509 = vsel %vm714, %v1505, 0
    %v1512 = vsel %vm714, %v1507, 0
    %1514 = vmatpush.bf16.xpose.msra.mxu0 0
    %1515 = vmatpush.bf16.xpose.msra.mxu0 0
    %1516 = vmatpush.bf16.xpose.msra.mxu0 0
    %1517 = vmatpush.bf16.xpose.msra.mxu0 0
    %1518 = vmatpush.bf16.xpose.msra.mxu0 0
    %1519 = vmatpush.bf16.xpose.msra.mxu0 0
    %1520 = vmatpush.bf16.xpose.msra.mxu0 0
    %1521 = vmatpush.bf16.xpose.msra.mxu0 %v1512
    %1522 = vmatmul.bf16.gmra.mxu0 %v1509
    %v1523 = vpop.f32.mrf.mxu0
    %v1524 = vadd.f32 0.0, %v1523
    %v1525 = vpop.f32.mrf.mxu0
    %1526 = vdwg.mxu0
    %v1527 = vsel %vm705, %v1455, -1e+09
    %v1528 = vsel %vm706, %v1478, -1e+09
    %v1529 = vsel %vm707, %v1501, -1e+09
    %v1530 = vsel %vm708, %v1524, -1e+09
    %v1531 = vsel %vm810, %v1527, -inf
    %1532 = vmax.xlane.f32.xlu0 %v1531
    %v1533 = vpop.xlane.xlu0 %1532
    %v1534 = vsel %vm810, %v1528, -inf
    %1535 = vmax.xlane.f32.xlu0 %v1534
    %v1536 = vpop.xlane.xlu0 %1535
    %v1537 = vsel %vm810, %v1529, -inf
    %1538 = vmax.xlane.f32.xlu0 %v1537
    %v1539 = vpop.xlane.xlu0 %1538
    %v1540 = vsel %vm810, %v1530, -inf
    %1541 = vmax.xlane.f32.xlu0 %v1540
    %v1542 = vpop.xlane.xlu0 %1541
    %v1543 = vsub.f32 %v1527, %v1533
    %v1544 = vsub.f32 %v1528, %v1536
    %v1545 = vsub.f32 %v1529, %v1539
    %v1546 = vsub.f32 %v1530, %v1542
    %v1547 = vmul.f32 %v1543, 1.442695
    %v1548 = vpow.pop %v1547
    %v1549 = vmul.f32 %v1544, 1.442695
    %v1550 = vpow.pop %v1549
    %v1551 = vmul.f32 %v1545, 1.442695
    %v1552 = vpow.pop %v1551
    %v1553 = vmul.f32 %v1546, 1.442695
    %v1554 = vpow.pop %v1553
    %v1555 = vsel %vm810, %v1548, 0.0
    %1556 = vadd.xlane.f32.xlu0 %v1555
    %v1557 = vpop.xlane.xlu0 %1556
    %v1558 = vsel %vm810, %v1550, 0.0
    %1559 = vadd.xlane.f32.xlu0 %v1558
    %v1560 = vpop.xlane.xlu0 %1559
    %v1561 = vsel %vm810, %v1552, 0.0
    %1562 = vadd.xlane.f32.xlu0 %v1561
    %v1563 = vpop.xlane.xlu0 %1562
    %v1564 = vsel %vm810, %v1554, 0.0
    %1565 = vadd.xlane.f32.xlu0 %v1564
    %v1566 = vpop.xlane.xlu0 %1565
    %v1567 = vrcp.pop %v1557
    %v1568 = vrcp.pop %v1560
    %v1569 = vrcp.pop %v1563
    %v1570 = vrcp.pop %v1566
    %v1571 = vmul.f32 %v1557, %v1567
    %v1572 = vmul.f32 %v1560, %v1568
    %v1573 = vmul.f32 %v1563, %v1569
    %v1574 = vmul.f32 %v1566, %v1570
    %v1575 = vsub.f32 2.0, %v1571
    %v1576 = vsub.f32 2.0, %v1572
    %v1577 = vsub.f32 2.0, %v1573
    %v1578 = vsub.f32 2.0, %v1574
    %v1579 = vmul.f32 %v1567, %v1575
    %v1580 = vmul.f32 %v1568, %v1576
    %v1581 = vmul.f32 %v1569, %v1577
    %v1582 = vmul.f32 %v1570, %v1578
    %v1583 = vmul.f32 %v1548, %v1579
    %v1584 = vmul.f32 %v1550, %v1580
    %v1585 = vmul.f32 %v1552, %v1581
    %v1586 = vmul.f32 %v1554, %v1582
    %v1587 = vpack.c.bf16 %v1583, %v1583
    %v1588 = vpack.c.bf16 %v1584, %v1584
    %v1589 = vpack.c.bf16 %v1585, %v1585
    %v1590 = vpack.c.bf16 %v1586, %v1586
    %1591 = vrot.lane.b32.xlu0 %v875, 32
    %v1592 = vpop.permute.xlu0 %1591
    %v1595 = vsel %vm810, %v1587, 0
    %1597 = vmatpush.bf16.msra.mxu0 0
    %1598 = vmatpush.bf16.msra.mxu0 0
    %1599 = vmatpush.bf16.msra.mxu0 0
    %1600 = vmatpush.bf16.msra.mxu0 0
    %1601 = vmatpush.bf16.msra.mxu0 0
    %1602 = vmatpush.bf16.msra.mxu0 0
    %1603 = vmatpush.bf16.msra.mxu0 0
    %1604 = vmatpush.bf16.msra.mxu0 %v1592
    %1605 = vmatmul.bf16.gmra.mxu0 %v1595
    %v1606 = vpop.f32.mrf.mxu0
    %v1607 = vadd.f32 0.0, %v1606
    %v1608 = vpop.f32.mrf.mxu0
    %1609 = vdwg.mxu0
    %1610 = vrot.lane.b32.xlu0 %v897, 32
    %v1611 = vpop.permute.xlu0 %1610
    %v1614 = vsel %vm810, %v1588, 0
    %1616 = vmatpush.bf16.msra.mxu0 0
    %1617 = vmatpush.bf16.msra.mxu0 0
    %1618 = vmatpush.bf16.msra.mxu0 0
    %1619 = vmatpush.bf16.msra.mxu0 0
    %1620 = vmatpush.bf16.msra.mxu0 0
    %1621 = vmatpush.bf16.msra.mxu0 0
    %1622 = vmatpush.bf16.msra.mxu0 0
    %1623 = vmatpush.bf16.msra.mxu0 %v1611
    %1624 = vmatmul.bf16.gmra.mxu0 %v1614
    %v1625 = vpop.f32.mrf.mxu0
    %v1626 = vadd.f32 0.0, %v1625
    %v1627 = vpop.f32.mrf.mxu0
    %1628 = vdwg.mxu0
    %1629 = vrot.lane.b32.xlu0 %v919, 32
    %v1630 = vpop.permute.xlu0 %1629
    %v1633 = vsel %vm810, %v1589, 0
    %1635 = vmatpush.bf16.msra.mxu0 0
    %1636 = vmatpush.bf16.msra.mxu0 0
    %1637 = vmatpush.bf16.msra.mxu0 0
    %1638 = vmatpush.bf16.msra.mxu0 0
    %1639 = vmatpush.bf16.msra.mxu0 0
    %1640 = vmatpush.bf16.msra.mxu0 0
    %1641 = vmatpush.bf16.msra.mxu0 0
    %1642 = vmatpush.bf16.msra.mxu0 %v1630
    %1643 = vmatmul.bf16.gmra.mxu0 %v1633
    %v1644 = vpop.f32.mrf.mxu0
    %v1645 = vadd.f32 0.0, %v1644
    %v1646 = vpop.f32.mrf.mxu0
    %1647 = vdwg.mxu0
    %1648 = vrot.lane.b32.xlu0 %v941, 32
    %v1649 = vpop.permute.xlu0 %1648
    %v1652 = vsel %vm810, %v1590, 0
    %1654 = vmatpush.bf16.msra.mxu0 0
    %1655 = vmatpush.bf16.msra.mxu0 0
    %1656 = vmatpush.bf16.msra.mxu0 0
    %1657 = vmatpush.bf16.msra.mxu0 0
    %1658 = vmatpush.bf16.msra.mxu0 0
    %1659 = vmatpush.bf16.msra.mxu0 0
    %1660 = vmatpush.bf16.msra.mxu0 0
    %1661 = vmatpush.bf16.msra.mxu0 %v1649
    %1662 = vmatmul.bf16.gmra.mxu0 %v1652
    %v1663 = vpop.f32.mrf.mxu0
    %v1664 = vadd.f32 0.0, %v1663
    %v1665 = vpop.f32.mrf.mxu0
    %1666 = vdwg.mxu0
    %1671 = vrot.lane.b32.xlu0 %v1143, 32
    %v1672 = vpop.permute.xlu0 %1671
    %1673 = vrot.lane.b32.xlu0 %v1162, 32
    %v1674 = vpop.permute.xlu0 %1673
    %1675 = vrot.lane.b32.xlu0 %v1181, 32
    %v1676 = vpop.permute.xlu0 %1675
    %1677 = vrot.lane.b32.xlu0 %v1200, 32
    %v1678 = vpop.permute.xlu0 %1677
    %1687 = vrot.lane.b32.xlu0 %v1375, 64
    %v1688 = vpop.permute.xlu0 %1687
    %1689 = vrot.lane.b32.xlu0 %v1394, 64
    %v1690 = vpop.permute.xlu0 %1689
    %1691 = vrot.lane.b32.xlu0 %v1413, 64
    %v1692 = vpop.permute.xlu0 %1691
    %1693 = vrot.lane.b32.xlu0 %v1432, 64
    %v1694 = vpop.permute.xlu0 %1693
    %1703 = vrot.lane.b32.xlu0 %v1607, 96
    %v1704 = vpop.permute.xlu0 %1703
    %1705 = vrot.lane.b32.xlu0 %v1626, 96
    %v1706 = vpop.permute.xlu0 %1705
    %1707 = vrot.lane.b32.xlu0 %v1645, 96
    %v1708 = vpop.permute.xlu0 %1707
    %1709 = vrot.lane.b32.xlu0 %v1664, 96
    %v1710 = vpop.permute.xlu0 %1709
    %v1715 = vsel %vm714, %v890, %v1672
    %v1716 = vsel %vm714, %v912, %v1674
    %v1717 = vsel %vm714, %v934, %v1676
    %v1718 = vsel %vm714, %v956, %v1678
    %vm1719 = vcmask 523264
    %v1720 = vsel %vm1719, %v1715, %v1688
    %v1721 = vsel %vm1719, %v1716, %v1690
    %v1722 = vsel %vm1719, %v1717, %v1692
    %v1723 = vsel %vm1719, %v1718, %v1694
    %vm1724 = vcmask 785408
    %v1725 = vsel %vm1724, %v1720, %v1704
    %v1726 = vsel %vm1724, %v1721, %v1706
    %v1727 = vsel %vm1724, %v1722, %v1708
    %v1728 = vsel %vm1724, %v1723, %v1710
    %v1729 = vrot.slane %v1727, 4
    %v1730 = vsel %vm124, %v1729, %v1725
    %v1731 = vrot.slane %v1725, 4
    %v1732 = vsel %vm124, %v1727, %v1731
    %v1734 = vunpack.c.l.s4 1983009808
    %v1735 = vunpack.c.0.s8 %v1734
    %v1736 = vperm.slane %v1730, %v1735
    %v1738 = vunpack.c.l.s4 1983009808
    %v1739 = vunpack.c.0.s8 %v1738
    %v1740 = vperm.slane %v1732, %v1739
    %v1741 = vrot.slane %v1728, 4
    %v1742 = vsel %vm124, %v1741, %v1726
    %v1743 = vrot.slane %v1726, 4
    %v1744 = vsel %vm124, %v1728, %v1743
    %v1746 = vunpack.c.l.s4 1983009808
    %v1747 = vunpack.c.0.s8 %v1746
    %v1748 = vperm.slane %v1742, %v1747
    %v1750 = vunpack.c.l.s4 1983009808
    %v1751 = vunpack.c.0.s8 %v1750
    %v1752 = vperm.slane %v1744, %v1751
    %v1753 = vrot.slane %v1748, 4
    %v1754 = vsel %vm124, %v1753, %v1736
    %v1755 = vrot.slane %v1736, 4
    %v1756 = vsel %vm124, %v1748, %v1755
    %v1758 = vunpack.c.l.s4 1934713408
    %v1759 = vunpack.c.0.s8 %v1758
    %v1760 = vperm.slane %v1754, %v1759
    %v1762 = vunpack.c.l.s4 1934713408
    %v1763 = vunpack.c.0.s8 %v1762
    %v1764 = vperm.slane %v1756, %v1763
    %v1765 = vrot.slane %v1752, 4
    %v1766 = vsel %vm124, %v1765, %v1740
    %v1767 = vrot.slane %v1740, 4
    %v1768 = vsel %vm124, %v1752, %v1767
    %v1770 = vunpack.c.l.s4 1934713408
    %v1771 = vunpack.c.0.s8 %v1770
    %v1772 = vperm.slane %v1766, %v1771
    %v1774 = vunpack.c.l.s4 1934713408
    %v1775 = vunpack.c.0.s8 %v1774
    %v1776 = vperm.slane %v1768, %v1775
    %v1777 = vrot.slane %v1760, 4
    %v1778 = vsel %vm124, 0.0, %v1777
    %v1779 = vrot.slane %v1764, 4
    %v1780 = vsel %vm124, 0.0, %v1779
    %v1781 = vrot.slane %v1772, 4
    %v1782 = vsel %vm124, 0.0, %v1781
    %v1783 = vrot.slane %v1776, 4
    %v1784 = vsel %vm124, 0.0, %v1783
    %1785 = vst [vmem:[#allocation11] sm:$0xf] %v1760
    %1786 = vst [vmem:[#allocation11 + $0x4] sm:$0xf] %v1778
    %1787 = vst [vmem:[#allocation11 + $0x8] sm:$0xf] %v1764
    %1788 = vst [vmem:[#allocation11 + $0xc] sm:$0xf] %v1780
    %1789 = vst [vmem:[#allocation11 + $0x10] sm:$0xf] %v1772
    %1790 = vst [vmem:[#allocation11 + $0x14] sm:$0xf] %v1782
    %1791 = vst [vmem:[#allocation11 + $0x18] sm:$0xf] %v1776
    %1792 = vst [vmem:[#allocation11 + $0x1c] sm:$0xf] %v1784
    // Predicated region
    $region62: #{tpu_custom_call.1} parent=1 // pred_check
      _
    $region63: #{tpu_custom_call.1} parent=1 // pred_check_branch
      %1794 = sbr.rel (0) target = $region65
    $region64: #{tpu_custom_call.1} parent=1 // pred_region
      %1796 = vsyncadd [#allocation4], 0
      %s1797 = sshll.u32 [#allocation11], 4
      %s1798 = int_to_ptr.vmem [resolvable:$true] %s1797
      %s1799 = sshll.u32 %s10, 4
      %s1800 = int_to_ptr.hbm [resolvable:$true] %s1799
      %1805 = dma.vmem_to_hbm [thread:$0]  %s1798, 512, %s1800, [#allocation4], 64, 64, 4
    $region65: #{tpu_custom_call.1} parent=1 // pred_fallthru
      _
    // Predicated region
    $region66: #{tpu_custom_call.1} parent=1 // pred_check
      _
    $region67: #{tpu_custom_call.1} parent=1 // pred_check_branch
      %1807 = sbr.rel (0) target = $region69
    $region68: #{tpu_custom_call.1} parent=1 // pred_region
      %1809 = dma.done [#allocation4], 512
    $region69: #{tpu_custom_call.1} parent=1 // pred_fallthru
      _
    %1810 = vsyncpa [#allocation3], 1
    %1811 = vsyncpa [#allocation6], 1
    %1812 = vsyncpa [#allocation9], 1
    %1813 = vsyncpa [#allocation4], 1

</llo_original>
